<compile_context>
chip_gen: v5e
topology: v5e:2x2
jax: 0.10.0
libtpu: 0.0.40
codegen_flags: <defaults>
</compile_context>

<pallas_src>
import jax
import jax.numpy as jnp
from jax.experimental import pallas as pl
from jax.experimental.pallas import tpu as pltpu

INPUT_SIZE = 784
HIDDEN_SIZE = 500
NUM_CLASSES = 10

_SUBLANE_BF16 = 16   # bf16 packs 2 rows per sublane -> keep the batch tile /16
_LANE = 128          # TPU lane width; hidden & logits padded to multiples of this
_MAX_BLOCK_M = 256   # fills the MXU rows; larger only reduces per-step overhead


def _mlp_kernel(x_ref, w1_ref, b1_ref, w2_ref, b2_ref, out_ref):
    # Fused fc1 -> ReLU -> fc2 on one VMEM-resident batch tile.
    # Matmuls run on the MXU with bf16 operands and f32 accumulation;
    # bias add + ReLU stay in f32 on the VPU.
    h = jnp.dot(x_ref[...], w1_ref[...],
                preferred_element_type=jnp.float32)            # [bm, Hp] f32
    h = jnp.maximum(h + b1_ref[...], 0.0)                      # bias + ReLU (f32)
    o = jnp.dot(h.astype(w2_ref.dtype), w2_ref[...],
                preferred_element_type=jnp.float32)            # [bm, Cp] f32
    out_ref[...] = o + b2_ref[...]


def _round_up(x, m):
    return (x + m - 1) // m * m


def neural_net_forward(x, w1, b1, w2, b2, *, block_m=None):
    """Forward pass of NeuralNet: logits = relu(x @ w1 + b1) @ w2 + b2.

    x : [B, 784]; w1: [784, 500]; b1: [1, 500] or [500]; w2: [500, 10]; b2: [1, 10] or [10].
    Returns [B, 10] float32 logits.
    """
    B, D = x.shape
    H = w1.shape[1]
    C = w2.shape[1]

    # --- batch tiling -----------------------------------------------------------
    if block_m is None:
        block_m = min(_round_up(B, _SUBLANE_BF16), _MAX_BLOCK_M)
    block_m = max(_SUBLANE_BF16, _round_up(block_m, _SUBLANE_BF16))
    grid_m = pl.cdiv(B, block_m)
    b_pad = grid_m * block_m

    # --- dtype / layout plumbing (wrapper-side) ----------------------------------
    h_pad = _round_up(H, _LANE)   # 500 -> 512: lane-dense hidden activation
    c_pad = _round_up(C, _LANE)   # 10  -> 128: unmasked lane-dense output stores

    x_p = x.astype(jnp.bfloat16)
    if b_pad != B:
        x_p = jnp.pad(x_p, ((0, b_pad - B), (0, 0)))

    w1_p = jnp.pad(w1.astype(jnp.bfloat16), ((0, 0), (0, h_pad - H)))
    b1_p = jnp.pad(b1.reshape(1, H).astype(jnp.float32), ((0, 0), (0, h_pad - H)))
    # Zero-padded hidden columns give relu(0 + 0) = 0, and the matching zero rows of
    # W2 below contribute nothing to the logits, so padding is numerically exact.
    w2_p = jnp.pad(w2.astype(jnp.bfloat16), ((0, h_pad - H), (0, c_pad - C)))
    b2_p = jnp.pad(b2.reshape(1, C).astype(jnp.float32), ((0, 0), (0, c_pad - C)))

    out = pl.pallas_call(
        _mlp_kernel,
        out_shape=jax.ShapeDtypeStruct((b_pad, c_pad), jnp.float32),
        grid_spec=pltpu.PrefetchScalarGridSpec(
            num_scalar_prefetch=0,
            grid=(grid_m,),
            in_specs=[
                pl.BlockSpec((block_m, D), lambda i: (i, 0)),     # x tile over batch
                pl.BlockSpec((D, h_pad), lambda i: (0, 0)),       # W1 (VMEM-resident)
                pl.BlockSpec((1, h_pad), lambda i: (0, 0)),       # b1
                pl.BlockSpec((h_pad, c_pad), lambda i: (0, 0)),   # W2 (lane-padded)
                pl.BlockSpec((1, c_pad), lambda i: (0, 0)),       # b2
            ],
            out_specs=pl.BlockSpec((block_m, c_pad), lambda i: (i, 0)),
        ),
        compiler_params=pltpu.CompilerParams(
            # Batch tiles are independent -> shard across TensorCores (v7x megacore).
            dimension_semantics=("parallel",),
        ),
    )(x_p, w1_p, b1_p, w2_p, b2_p)

    return out[:B, :C]


def init_params(key, input_size, hidden_size, num_classes):
    """Deterministic init mimicking PyTorch nn.Linear default (uniform ±1/sqrt(fan_in))."""
    k1, k2, k3, k4 = jax.random.split(key, 4)
    bound1 = 1.0 / jnp.sqrt(float(input_size))
    bound2 = 1.0 / jnp.sqrt(float(hidden_size))
    w1 = jax.random.uniform(k1, (input_size, hidden_size), jnp.float32, -bound1, bound1)
    b1 = jax.random.uniform(k2, (1, hidden_size), jnp.float32, -bound1, bound1)
    w2 = jax.random.uniform(k3, (hidden_size, num_classes), jnp.float32, -bound2, bound2)
    b2 = jax.random.uniform(k4, (1, num_classes), jnp.float32, -bound2, bound2)
    return w1, b1, w2, b2


if __name__ == "__main__":
    key = jax.random.PRNGKey(0)
    k_x, k_p = jax.random.split(key)

    batch = 8  # small demo batch; feature dims fixed by the module (784 -> 500 -> 10)
    x = jax.random.normal(k_x, (batch, INPUT_SIZE), jnp.float32)
    w1, b1, w2, b2 = init_params(k_p, INPUT_SIZE, HIDDEN_SIZE, NUM_CLASSES)

    out = neural_net_forward(x, w1, b1, w2, b2)
    out = jax.block_until_ready(out)

    assert out.shape == (batch, NUM_CLASSES)
    assert out.dtype == jnp.float32

    # Reference with matching bf16-operand / f32-accumulation matmuls.
    xb, w1b, w2b = (a.astype(jnp.bfloat16) for a in (x, w1, w2))
    h_ref = jnp.maximum(jnp.dot(xb, w1b, preferred_element_type=jnp.float32) + b1, 0.0)
    ref_bf16 = jnp.dot(h_ref.astype(jnp.bfloat16), w2b,
                       preferred_element_type=jnp.float32) + b2
    assert jnp.allclose(out, ref_bf16, atol=1e-2, rtol=1e-2)

    # Loose sanity check against the full-f32 forward pass.
    ref_f32 = jnp.maximum(x @ w1 + b1, 0.0) @ w2 + b2
    assert jnp.allclose(out, ref_f32, atol=5e-2, rtol=5e-2)

    print("KERNEL_OK")
</pallas_src>

<mosaic_0001>
module attributes {stable_mosaic.version = 11 : i64} {
  func.func @_mlp_kernel(%arg0: i32, %arg1: memref<16x784xbf16, #tpu.memory_space<vmem>>, %arg2: memref<784x512xbf16, #tpu.memory_space<vmem>>, %arg3: memref<1x512xf32, #tpu.memory_space<vmem>>, %arg4: memref<512x128xbf16, #tpu.memory_space<vmem>>, %arg5: memref<1x128xf32, #tpu.memory_space<vmem>>, %arg6: memref<16x128xf32, #tpu.memory_space<vmem>>) attributes {dimension_semantics = [#tpu.dimension_semantics<parallel>], iteration_bounds = array<i64: 1>, scalar_prefetch = 0 : i64, scratch_operands = 0 : i64, tpu.core_type = #tpu.core_type<tc>, window_params = [{transform_indices = @transform_0, window_bounds = array<i64: 16, 784>}, {pipeline_mode = #tpu.pipeline_mode<synchronous>, transform_indices = @transform_1, window_bounds = array<i64: 784, 512>}, {pipeline_mode = #tpu.pipeline_mode<synchronous>, transform_indices = @transform_2, window_bounds = array<i64: 1, 512>}, {pipeline_mode = #tpu.pipeline_mode<synchronous>, transform_indices = @transform_3, window_bounds = array<i64: 512, 128>}, {pipeline_mode = #tpu.pipeline_mode<synchronous>, transform_indices = @transform_4, window_bounds = array<i64: 1, 128>}, {transform_indices = @transform_5, window_bounds = array<i64: 16, 128>}]} {
    %c0 = arith.constant 0 : index
    %c0_0 = arith.constant 0 : index
    %0 = vector.load %arg1[%c0, %c0_0] : memref<16x784xbf16, #tpu.memory_space<vmem>>, vector<16x784xbf16>
    %c0_1 = arith.constant 0 : index
    %c0_2 = arith.constant 0 : index
    %1 = vector.load %arg2[%c0_1, %c0_2] : memref<784x512xbf16, #tpu.memory_space<vmem>>, vector<784x512xbf16>
    %cst = arith.constant dense<0.000000e+00> : vector<16x512xf32>
    %2 = tpu.matmul %0, %1, %cst {dimension_numbers = #tpu.dot_dimension_numbers<[1], [0], [0], [1], [0, 0, 1, 1], [], []>} : vector<16x784xbf16>, vector<784x512xbf16>, vector<16x512xf32> -> vector<16x512xf32>
    %c0_3 = arith.constant 0 : index
    %c0_4 = arith.constant 0 : index
    %3 = vector.load %arg3[%c0_3, %c0_4] : memref<1x512xf32, #tpu.memory_space<vmem>>, vector<1x512xf32>
    %4 = vector.broadcast %3 : vector<1x512xf32> to vector<16x512xf32>
    %5 = arith.addf %2, %4 : vector<16x512xf32>
    %cst_5 = arith.constant 0.000000e+00 : f32
    %6 = vector.broadcast %cst_5 : f32 to vector<16x512xf32>
    %7 = arith.maximumf %5, %6 : vector<16x512xf32>
    %8 = arith.truncf %7 : vector<16x512xf32> to vector<16x512xbf16>
    %c0_6 = arith.constant 0 : index
    %c0_7 = arith.constant 0 : index
    %9 = vector.load %arg4[%c0_6, %c0_7] : memref<512x128xbf16, #tpu.memory_space<vmem>>, vector<512x128xbf16>
    %cst_8 = arith.constant dense<0.000000e+00> : vector<16x128xf32>
    %10 = tpu.matmul %8, %9, %cst_8 {dimension_numbers = #tpu.dot_dimension_numbers<[1], [0], [0], [1], [0, 0, 1, 1], [], []>} : vector<16x512xbf16>, vector<512x128xbf16>, vector<16x128xf32> -> vector<16x128xf32>
    %c0_9 = arith.constant 0 : index
    %c0_10 = arith.constant 0 : index
    %11 = vector.load %arg5[%c0_9, %c0_10] : memref<1x128xf32, #tpu.memory_space<vmem>>, vector<1x128xf32>
    %12 = vector.broadcast %11 : vector<1x128xf32> to vector<16x128xf32>
    %13 = arith.addf %10, %12 : vector<16x128xf32>
    %c0_11 = arith.constant 0 : index
    %c0_12 = arith.constant 0 : index
    %14 = vector.load %arg6[%c0_11, %c0_12] : memref<16x128xf32, #tpu.memory_space<vmem>>, vector<16x128xf32>
    tpu.vector_store %arg6[%c0_11, %c0_12], %13 {strides = array<i32>} : memref<16x128xf32, #tpu.memory_space<vmem>>, vector<16x128xf32>,
    return
  }
  func.func @transform_0(%arg0: i32) -> (i32, i32) {
    %c0_i32 = arith.constant 0 : i32
    %c0_i32_0 = arith.constant 0 : i32
    return %arg0, %c0_i32 : i32, i32
  }
  func.func @transform_1(%arg0: i32) -> (i32, i32) {
    %c0_i32 = arith.constant 0 : i32
    %c0_i32_0 = arith.constant 0 : i32
    %c0_i32_1 = arith.constant 0 : i32
    return %c0_i32, %c0_i32_0 : i32, i32
  }
  func.func @transform_2(%arg0: i32) -> (i32, i32) {
    %c0_i32 = arith.constant 0 : i32
    %c0_i32_0 = arith.constant 0 : i32
    %c0_i32_1 = arith.constant 0 : i32
    return %c0_i32, %c0_i32_0 : i32, i32
  }
  func.func @transform_3(%arg0: i32) -> (i32, i32) {
    %c0_i32 = arith.constant 0 : i32
    %c0_i32_0 = arith.constant 0 : i32
    %c0_i32_1 = arith.constant 0 : i32
    return %c0_i32, %c0_i32_0 : i32, i32
  }
  func.func @transform_4(%arg0: i32) -> (i32, i32) {
    %c0_i32 = arith.constant 0 : i32
    %c0_i32_0 = arith.constant 0 : i32
    %c0_i32_1 = arith.constant 0 : i32
    return %c0_i32, %c0_i32_0 : i32, i32
  }
  func.func @transform_5(%arg0: i32) -> (i32, i32) {
    %c0_i32 = arith.constant 0 : i32
    %c0_i32_0 = arith.constant 0 : i32
    return %arg0, %c0_i32 : i32, i32
  }
}

</mosaic_0001>

<llo_original>
// kernel: tpu_custom_call.1
$region0: #{tpu_custom_call.1}
  #allocation0 [shape = 'u32[]', space=smem, size = 0x4, offset = 0x4, fixed_abs, tag = 'smem constant byte address 0x4 - core index']
  #allocation1 [shape = 'u32[72,128]{1,0:T(1,128)}', space=vmem, size = 0x9000, scoped, tag = 'internal scratch']
  %s0 = inlined_call_operand.hbm [shape: bf16[16,784], index: 0, kind: input, shape index: {}]
  %s1 = inlined_call_operand.hbm [shape: bf16[784,512], index: 1, kind: input, shape index: {}]
  %s2 = inlined_call_operand.hbm [shape: f32[1,512], index: 2, kind: input, shape index: {}]
  %s3 = inlined_call_operand.hbm [shape: bf16[512,128], index: 3, kind: input, shape index: {}]
  %s4 = inlined_call_operand.vmem [shape: f32[1,128], index: 4, kind: input, shape index: {}]
  %s5 = inlined_call_operand.hbm [shape: f32[16,128], index: 5, kind: output, shape index: {}]
  %s6 = sld [smem:[#allocation0]]
  $region46: #{tpu_custom_call.1} parent=0
    _
  %s8 = ssub.s32 1, %s6
  %s9 = scalar_select 0, %s8, %s6
  $region1: #{tpu_custom_call.1} parent=0
    #allocation2 [shape = 'u8[28672]{0}', space=vmem, size = 0x7000, scoped, tag = 'input window, operand 0, single buffered']
    #allocation3 [shape = 's32[1]{0}', space=sflag, size = 0x4, scoped, tag = 'scoped memory for tpu_custom_call.1']
    #allocation4 [shape = 's32[1]{0}', space=sflag, size = 0x4, scoped, tag = 'scoped memory for tpu_custom_call.1']
    #allocation5 [shape = 'u8[802816]{0}', space=vmem, size = 0xc4000, scoped, tag = 'input window, operand 1, single buffered']
    #allocation6 [shape = 's32[1]{0}', space=sflag, size = 0x4, scoped, tag = 'scoped memory for tpu_custom_call.1']
    #allocation7 [shape = 'u8[2048]{0}', space=vmem, size = 0x800, scoped, tag = 'input window, operand 2, single buffered']
    #allocation8 [shape = 'u8[131072]{0}', space=vmem, size = 0x20000, scoped, tag = 'input window, operand 3, single buffered']
    #allocation9 [shape = 's32[1]{0}', space=sflag, size = 0x4, scoped, tag = 'scoped memory for tpu_custom_call.1']
    #allocation10 [shape = 'u8[8192]{0}', space=vmem, size = 0x2000, scoped, tag = 'output window, operand 0, single buffered']
    %10 = vsyncpa [#allocation3], 0
    %11 = vsyncpa [#allocation6], 0
    %12 = vsyncpa [#allocation9], 0
    %13 = vsyncpa [#allocation4], 0
    // Predicated region
    $region2: #{tpu_custom_call.1} parent=1 // pred_check
      _
    $region3: #{tpu_custom_call.1} parent=1 // pred_check_branch
      %15 = sbr.rel (0) target = $region5
    $region4: #{tpu_custom_call.1} parent=1 // pred_region
      %17 = vsyncadd [#allocation3], 0
      %s18 = sshll.u32 %s0, 4
      %s19 = int_to_ptr.hbm [resolvable:$true] %s18
      %s20 = sshll.u32 [#allocation2], 4
      %s21 = int_to_ptr.vmem [resolvable:$true] %s20
      %26 = dma.hbm_to_vmem [thread:$0]  %s19, 896, %s21, [#allocation3], 448, 448, 28
    $region5: #{tpu_custom_call.1} parent=1 // pred_fallthru
      _
    // Predicated region
    $region6: #{tpu_custom_call.1} parent=1 // pred_check
      _
    $region7: #{tpu_custom_call.1} parent=1 // pred_check_branch
      %28 = sbr.rel (0) target = $region9
    $region8: #{tpu_custom_call.1} parent=1 // pred_region
      %30 = vsyncadd [#allocation6], 0
      %s31 = sshll.u32 %s1, 4
      %s32 = int_to_ptr.hbm [resolvable:$true] %s31
      %s33 = sshll.u32 [#allocation5], 4
      %s34 = int_to_ptr.vmem [resolvable:$true] %s33
      %39 = dma.hbm_to_vmem [thread:$0]  %s32, 25088, %s34, [#allocation6], 256, 256, 16
    $region9: #{tpu_custom_call.1} parent=1 // pred_fallthru
      _
    // Predicated region
    $region10: #{tpu_custom_call.1} parent=1 // pred_check
      _
    $region11: #{tpu_custom_call.1} parent=1 // pred_check_branch
      %41 = sbr.rel (0) target = $region13
    $region12: #{tpu_custom_call.1} parent=1 // pred_region
      %43 = vsyncadd [#allocation6], 0
      %s45 = sshll.u32 %s2, 4
      %s46 = int_to_ptr.hbm [resolvable:$true] %s45
      %s47 = sshll.u32 [#allocation7], 4
      %s48 = int_to_ptr.vmem [resolvable:$true] %s47
      %50 = dma.hbm_to_vmem [thread:$0]  %s46, 64, %s48, [#allocation6]
    $region13: #{tpu_custom_call.1} parent=1 // pred_fallthru
      _
    // Predicated region
    $region14: #{tpu_custom_call.1} parent=1 // pred_check
      _
    $region15: #{tpu_custom_call.1} parent=1 // pred_check_branch
      %52 = sbr.rel (0) target = $region17
    $region16: #{tpu_custom_call.1} parent=1 // pred_region
      %54 = vsyncadd [#allocation9], 0
      %s55 = sshll.u32 %s3, 4
      %s56 = int_to_ptr.hbm [resolvable:$true] %s55
      %s57 = sshll.u32 [#allocation8], 4
      %s58 = int_to_ptr.vmem [resolvable:$true] %s57
      %63 = dma.hbm_to_vmem [thread:$0]  %s56, 4096, %s58, [#allocation9], 64, 64, 4
    $region17: #{tpu_custom_call.1} parent=1 // pred_fallthru
      _
    // Predicated region
    $region18: #{tpu_custom_call.1} parent=1 // pred_check
      _
    $region19: #{tpu_custom_call.1} parent=1 // pred_check_branch
      %65 = sbr.rel (0) target = $region21
    $region20: #{tpu_custom_call.1} parent=1 // pred_region
      _
    $region21: #{tpu_custom_call.1} parent=1 // pred_fallthru
      _
    // Predicated region
    $region22: #{tpu_custom_call.1} parent=1 // pred_check
      _
    $region23: #{tpu_custom_call.1} parent=1 // pred_check_branch
      %67 = sbr.rel (0) target = $region25
    $region24: #{tpu_custom_call.1} parent=1 // pred_region
      %69 = dma.done [#allocation3], 896
    $region25: #{tpu_custom_call.1} parent=1 // pred_fallthru
      _
    // Predicated region
    $region26: #{tpu_custom_call.1} parent=1 // pred_check
      _
    $region27: #{tpu_custom_call.1} parent=1 // pred_check_branch
      %71 = sbr.rel (0) target = $region29
    $region28: #{tpu_custom_call.1} parent=1 // pred_region
      %73 = dma.done [#allocation6], 25088
    $region29: #{tpu_custom_call.1} parent=1 // pred_fallthru
      _
    // Predicated region
    $region30: #{tpu_custom_call.1} parent=1 // pred_check
      _
    $region31: #{tpu_custom_call.1} parent=1 // pred_check_branch
      %75 = sbr.rel (0) target = $region33
    $region32: #{tpu_custom_call.1} parent=1 // pred_region
      %77 = dma.done [#allocation6], 64
    $region33: #{tpu_custom_call.1} parent=1 // pred_fallthru
      _
    // Predicated region
    $region34: #{tpu_custom_call.1} parent=1 // pred_check
      _
    $region35: #{tpu_custom_call.1} parent=1 // pred_check_branch
      %79 = sbr.rel (0) target = $region37
    $region36: #{tpu_custom_call.1} parent=1 // pred_region
      %81 = dma.done [#allocation9], 4096
    $region37: #{tpu_custom_call.1} parent=1 // pred_fallthru
      _
    %v83 = vld [vmem:[#allocation2] sm:$0xff]
    %v84 = vld [vmem:[#allocation2 + $0x8] sm:$0xff]
    %v85 = vld [vmem:[#allocation2 + $0x10] sm:$0xff]
    %v86 = vld [vmem:[#allocation2 + $0x18] sm:$0xf]
    %v87 = vld [vmem:[#allocation2 + $0x1c] sm:$0xff]
    %v88 = vld [vmem:[#allocation2 + $0x24] sm:$0xff]
    %v89 = vld [vmem:[#allocation2 + $0x2c] sm:$0xff]
    %v90 = vld [vmem:[#allocation2 + $0x34] sm:$0xf]
    %v91 = vld [vmem:[#allocation5] sm:$0xff]
    %v92 = vld [vmem:[#allocation5 + $0x8] sm:$0xff]
    %v93 = vld [vmem:[#allocation5 + $0x10] sm:$0xff]
    %v94 = vld [vmem:[#allocation5 + $0x18] sm:$0xff]
    %v95 = vld [vmem:[#allocation5 + $0x20] sm:$0xff]
    %v96 = vld [vmem:[#allocation5 + $0x28] sm:$0xff]
    %v97 = vld [vmem:[#allocation5 + $0x30] sm:$0xff]
    %v98 = vld [vmem:[#allocation5 + $0x38] sm:$0xff]
    %v99 = vld [vmem:[#allocation5 + $0x40] sm:$0xff]
    %v100 = vld [vmem:[#allocation5 + $0x48] sm:$0xff]
    %v101 = vld [vmem:[#allocation5 + $0x50] sm:$0xff]
    %v102 = vld [vmem:[#allocation5 + $0x58] sm:$0xff]
    %v103 = vld [vmem:[#allocation5 + $0x60] sm:$0xff]
    %v104 = vld [vmem:[#allocation5 + $0x68] sm:$0xff]
    %v105 = vld [vmem:[#allocation5 + $0x70] sm:$0xff]
    %v106 = vld [vmem:[#allocation5 + $0x78] sm:$0xff]
    %v107 = vld [vmem:[#allocation5 + $0x80] sm:$0xff]
    %v108 = vld [vmem:[#allocation5 + $0x88] sm:$0xff]
    %v109 = vld [vmem:[#allocation5 + $0x90] sm:$0xff]
    %v110 = vld [vmem:[#allocation5 + $0x98] sm:$0xff]
    %v111 = vld [vmem:[#allocation5 + $0xa0] sm:$0xff]
    %v112 = vld [vmem:[#allocation5 + $0xa8] sm:$0xff]
    %v113 = vld [vmem:[#allocation5 + $0xb0] sm:$0xff]
    %v114 = vld [vmem:[#allocation5 + $0xb8] sm:$0xff]
    %v115 = vld [vmem:[#allocation5 + $0xc0] sm:$0xff]
    %v116 = vld [vmem:[#allocation5 + $0xc8] sm:$0xff]
    %v117 = vld [vmem:[#allocation5 + $0xd0] sm:$0xff]
    %v118 = vld [vmem:[#allocation5 + $0xd8] sm:$0xff]
    %v119 = vld [vmem:[#allocation5 + $0xe0] sm:$0xff]
    %v120 = vld [vmem:[#allocation5 + $0xe8] sm:$0xff]
    %v121 = vld [vmem:[#allocation5 + $0xf0] sm:$0xff]
    %v122 = vld [vmem:[#allocation5 + $0xf8] sm:$0xff]
    %v123 = vld [vmem:[#allocation5 + $0x100] sm:$0xff]
    %v124 = vld [vmem:[#allocation5 + $0x108] sm:$0xff]
    %v125 = vld [vmem:[#allocation5 + $0x110] sm:$0xff]
    %v126 = vld [vmem:[#allocation5 + $0x118] sm:$0xff]
    %v127 = vld [vmem:[#allocation5 + $0x120] sm:$0xff]
    %v128 = vld [vmem:[#allocation5 + $0x128] sm:$0xff]
    %v129 = vld [vmem:[#allocation5 + $0x130] sm:$0xff]
    %v130 = vld [vmem:[#allocation5 + $0x138] sm:$0xff]
    %v131 = vld [vmem:[#allocation5 + $0x140] sm:$0xff]
    %v132 = vld [vmem:[#allocation5 + $0x148] sm:$0xff]
    %v133 = vld [vmem:[#allocation5 + $0x150] sm:$0xff]
    %v134 = vld [vmem:[#allocation5 + $0x158] sm:$0xff]
    %v135 = vld [vmem:[#allocation5 + $0x160] sm:$0xff]
    %v136 = vld [vmem:[#allocation5 + $0x168] sm:$0xff]
    %v137 = vld [vmem:[#allocation5 + $0x170] sm:$0xff]
    %v138 = vld [vmem:[#allocation5 + $0x178] sm:$0xff]
    %v139 = vld [vmem:[#allocation5 + $0x180] sm:$0xff]
    %v140 = vld [vmem:[#allocation5 + $0x188] sm:$0xff]
    %v141 = vld [vmem:[#allocation5 + $0x190] sm:$0xff]
    %v142 = vld [vmem:[#allocation5 + $0x198] sm:$0xff]
    %v143 = vld [vmem:[#allocation5 + $0x1a0] sm:$0xff]
    %v144 = vld [vmem:[#allocation5 + $0x1a8] sm:$0xff]
    %v145 = vld [vmem:[#allocation5 + $0x1b0] sm:$0xff]
    %v146 = vld [vmem:[#allocation5 + $0x1b8] sm:$0xff]
    %v147 = vld [vmem:[#allocation5 + $0x1c0] sm:$0xff]
    %v148 = vld [vmem:[#allocation5 + $0x1c8] sm:$0xff]
    %v149 = vld [vmem:[#allocation5 + $0x1d0] sm:$0xff]
    %v150 = vld [vmem:[#allocation5 + $0x1d8] sm:$0xff]
    %v151 = vld [vmem:[#allocation5 + $0x1e0] sm:$0xff]
    %v152 = vld [vmem:[#allocation5 + $0x1e8] sm:$0xff]
    %v153 = vld [vmem:[#allocation5 + $0x1f0] sm:$0xff]
    %v154 = vld [vmem:[#allocation5 + $0x1f8] sm:$0xff]
    %v155 = vld [vmem:[#allocation5 + $0x200] sm:$0xff]
    %v156 = vld [vmem:[#allocation5 + $0x208] sm:$0xff]
    %v157 = vld [vmem:[#allocation5 + $0x210] sm:$0xff]
    %v158 = vld [vmem:[#allocation5 + $0x218] sm:$0xff]
    %v159 = vld [vmem:[#allocation5 + $0x220] sm:$0xff]
    %v160 = vld [vmem:[#allocation5 + $0x228] sm:$0xff]
    %v161 = vld [vmem:[#allocation5 + $0x230] sm:$0xff]
    %v162 = vld [vmem:[#allocation5 + $0x238] sm:$0xff]
    %v163 = vld [vmem:[#allocation5 + $0x240] sm:$0xff]
    %v164 = vld [vmem:[#allocation5 + $0x248] sm:$0xff]
    %v165 = vld [vmem:[#allocation5 + $0x250] sm:$0xff]
    %v166 = vld [vmem:[#allocation5 + $0x258] sm:$0xff]
    %v167 = vld [vmem:[#allocation5 + $0x260] sm:$0xff]
    %v168 = vld [vmem:[#allocation5 + $0x268] sm:$0xff]
    %v169 = vld [vmem:[#allocation5 + $0x270] sm:$0xff]
    %v170 = vld [vmem:[#allocation5 + $0x278] sm:$0xff]
    %v171 = vld [vmem:[#allocation5 + $0x280] sm:$0xff]
    %v172 = vld [vmem:[#allocation5 + $0x288] sm:$0xff]
    %v173 = vld [vmem:[#allocation5 + $0x290] sm:$0xff]
    %v174 = vld [vmem:[#allocation5 + $0x298] sm:$0xff]
    %v175 = vld [vmem:[#allocation5 + $0x2a0] sm:$0xff]
    %v176 = vld [vmem:[#allocation5 + $0x2a8] sm:$0xff]
    %v177 = vld [vmem:[#allocation5 + $0x2b0] sm:$0xff]
    %v178 = vld [vmem:[#allocation5 + $0x2b8] sm:$0xff]
    %v179 = vld [vmem:[#allocation5 + $0x2c0] sm:$0xff]
    %v180 = vld [vmem:[#allocation5 + $0x2c8] sm:$0xff]
    %v181 = vld [vmem:[#allocation5 + $0x2d0] sm:$0xff]
    %v182 = vld [vmem:[#allocation5 + $0x2d8] sm:$0xff]
    %v183 = vld [vmem:[#allocation5 + $0x2e0] sm:$0xff]
    %v184 = vld [vmem:[#allocation5 + $0x2e8] sm:$0xff]
    %v185 = vld [vmem:[#allocation5 + $0x2f0] sm:$0xff]
    %v186 = vld [vmem:[#allocation5 + $0x2f8] sm:$0xff]
    %v187 = vld [vmem:[#allocation5 + $0x300] sm:$0xff]
    %v188 = vld [vmem:[#allocation5 + $0x308] sm:$0xff]
    %v189 = vld [vmem:[#allocation5 + $0x310] sm:$0xff]
    %v190 = vld [vmem:[#allocation5 + $0x318] sm:$0xff]
    %v191 = vld [vmem:[#allocation5 + $0x320] sm:$0xff]
    %v192 = vld [vmem:[#allocation5 + $0x328] sm:$0xff]
    %v193 = vld [vmem:[#allocation5 + $0x330] sm:$0xff]
    %v194 = vld [vmem:[#allocation5 + $0x338] sm:$0xff]
    %v195 = vld [vmem:[#allocation5 + $0x340] sm:$0xff]
    %v196 = vld [vmem:[#allocation5 + $0x348] sm:$0xff]
    %v197 = vld [vmem:[#allocation5 + $0x350] sm:$0xff]
    %v198 = vld [vmem:[#allocation5 + $0x358] sm:$0xff]
    %v199 = vld [vmem:[#allocation5 + $0x360] sm:$0xff]
    %v200 = vld [vmem:[#allocation5 + $0x368] sm:$0xff]
    %v201 = vld [vmem:[#allocation5 + $0x370] sm:$0xff]
    %v202 = vld [vmem:[#allocation5 + $0x378] sm:$0xff]
    %v203 = vld [vmem:[#allocation5 + $0x380] sm:$0xff]
    %v204 = vld [vmem:[#allocation5 + $0x388] sm:$0xff]
    %v205 = vld [vmem:[#allocation5 + $0x390] sm:$0xff]
    %v206 = vld [vmem:[#allocation5 + $0x398] sm:$0xff]
    %v207 = vld [vmem:[#allocation5 + $0x3a0] sm:$0xff]
    %v208 = vld [vmem:[#allocation5 + $0x3a8] sm:$0xff]
    %v209 = vld [vmem:[#allocation5 + $0x3b0] sm:$0xff]
    %v210 = vld [vmem:[#allocation5 + $0x3b8] sm:$0xff]
    %v211 = vld [vmem:[#allocation5 + $0x3c0] sm:$0xff]
    %v212 = vld [vmem:[#allocation5 + $0x3c8] sm:$0xff]
    %v213 = vld [vmem:[#allocation5 + $0x3d0] sm:$0xff]
    %v214 = vld [vmem:[#allocation5 + $0x3d8] sm:$0xff]
    %v215 = vld [vmem:[#allocation5 + $0x3e0] sm:$0xff]
    %v216 = vld [vmem:[#allocation5 + $0x3e8] sm:$0xff]
    %v217 = vld [vmem:[#allocation5 + $0x3f0] sm:$0xff]
    %v218 = vld [vmem:[#allocation5 + $0x3f8] sm:$0xff]
    %v219 = vld [vmem:[#allocation5 + $0x400] sm:$0xff]
    %v220 = vld [vmem:[#allocation5 + $0x408] sm:$0xff]
    %v221 = vld [vmem:[#allocation5 + $0x410] sm:$0xff]
    %v222 = vld [vmem:[#allocation5 + $0x418] sm:$0xff]
    %v223 = vld [vmem:[#allocation5 + $0x420] sm:$0xff]
    %v224 = vld [vmem:[#allocation5 + $0x428] sm:$0xff]
    %v225 = vld [vmem:[#allocation5 + $0x430] sm:$0xff]
    %v226 = vld [vmem:[#allocation5 + $0x438] sm:$0xff]
    %v227 = vld [vmem:[#allocation5 + $0x440] sm:$0xff]
    %v228 = vld [vmem:[#allocation5 + $0x448] sm:$0xff]
    %v229 = vld [vmem:[#allocation5 + $0x450] sm:$0xff]
    %v230 = vld [vmem:[#allocation5 + $0x458] sm:$0xff]
    %v231 = vld [vmem:[#allocation5 + $0x460] sm:$0xff]
    %v232 = vld [vmem:[#allocation5 + $0x468] sm:$0xff]
    %v233 = vld [vmem:[#allocation5 + $0x470] sm:$0xff]
    %v234 = vld [vmem:[#allocation5 + $0x478] sm:$0xff]
    %v235 = vld [vmem:[#allocation5 + $0x480] sm:$0xff]
    %v236 = vld [vmem:[#allocation5 + $0x488] sm:$0xff]
    %v237 = vld [vmem:[#allocation5 + $0x490] sm:$0xff]
    %v238 = vld [vmem:[#allocation5 + $0x498] sm:$0xff]
    %v239 = vld [vmem:[#allocation5 + $0x4a0] sm:$0xff]
    %v240 = vld [vmem:[#allocation5 + $0x4a8] sm:$0xff]
    %v241 = vld [vmem:[#allocation5 + $0x4b0] sm:$0xff]
    %v242 = vld [vmem:[#allocation5 + $0x4b8] sm:$0xff]
    %v243 = vld [vmem:[#allocation5 + $0x4c0] sm:$0xff]
    %v244 = vld [vmem:[#allocation5 + $0x4c8] sm:$0xff]
    %v245 = vld [vmem:[#allocation5 + $0x4d0] sm:$0xff]
    %v246 = vld [vmem:[#allocation5 + $0x4d8] sm:$0xff]
    %v247 = vld [vmem:[#allocation5 + $0x4e0] sm:$0xff]
    %v248 = vld [vmem:[#allocation5 + $0x4e8] sm:$0xff]
    %v249 = vld [vmem:[#allocation5 + $0x4f0] sm:$0xff]
    %v250 = vld [vmem:[#allocation5 + $0x4f8] sm:$0xff]
    %v251 = vld [vmem:[#allocation5 + $0x500] sm:$0xff]
    %v252 = vld [vmem:[#allocation5 + $0x508] sm:$0xff]
    %v253 = vld [vmem:[#allocation5 + $0x510] sm:$0xff]
    %v254 = vld [vmem:[#allocation5 + $0x518] sm:$0xff]
    %v255 = vld [vmem:[#allocation5 + $0x520] sm:$0xff]
    %v256 = vld [vmem:[#allocation5 + $0x528] sm:$0xff]
    %v257 = vld [vmem:[#allocation5 + $0x530] sm:$0xff]
    %v258 = vld [vmem:[#allocation5 + $0x538] sm:$0xff]
    %v259 = vld [vmem:[#allocation5 + $0x540] sm:$0xff]
    %v260 = vld [vmem:[#allocation5 + $0x548] sm:$0xff]
    %v261 = vld [vmem:[#allocation5 + $0x550] sm:$0xff]
    %v262 = vld [vmem:[#allocation5 + $0x558] sm:$0xff]
    %v263 = vld [vmem:[#allocation5 + $0x560] sm:$0xff]
    %v264 = vld [vmem:[#allocation5 + $0x568] sm:$0xff]
    %v265 = vld [vmem:[#allocation5 + $0x570] sm:$0xff]
    %v266 = vld [vmem:[#allocation5 + $0x578] sm:$0xff]
    %v267 = vld [vmem:[#allocation5 + $0x580] sm:$0xff]
    %v268 = vld [vmem:[#allocation5 + $0x588] sm:$0xff]
    %v269 = vld [vmem:[#allocation5 + $0x590] sm:$0xff]
    %v270 = vld [vmem:[#allocation5 + $0x598] sm:$0xff]
    %v271 = vld [vmem:[#allocation5 + $0x5a0] sm:$0xff]
    %v272 = vld [vmem:[#allocation5 + $0x5a8] sm:$0xff]
    %v273 = vld [vmem:[#allocation5 + $0x5b0] sm:$0xff]
    %v274 = vld [vmem:[#allocation5 + $0x5b8] sm:$0xff]
    %v275 = vld [vmem:[#allocation5 + $0x5c0] sm:$0xff]
    %v276 = vld [vmem:[#allocation5 + $0x5c8] sm:$0xff]
    %v277 = vld [vmem:[#allocation5 + $0x5d0] sm:$0xff]
    %v278 = vld [vmem:[#allocation5 + $0x5d8] sm:$0xff]
    %v279 = vld [vmem:[#allocation5 + $0x5e0] sm:$0xff]
    %v280 = vld [vmem:[#allocation5 + $0x5e8] sm:$0xff]
    %v281 = vld [vmem:[#allocation5 + $0x5f0] sm:$0xff]
    %v282 = vld [vmem:[#allocation5 + $0x5f8] sm:$0xff]
    %v283 = vld [vmem:[#allocation5 + $0x600] sm:$0xff]
    %v284 = vld [vmem:[#allocation5 + $0x608] sm:$0xff]
    %v285 = vld [vmem:[#allocation5 + $0x610] sm:$0xff]
    %v286 = vld [vmem:[#allocation5 + $0x618] sm:$0xff]
    %v287 = vld [vmem:[#allocation7] sm:$0xf]
    %v289 = vperm.slane %v287, 0
    %v290 = vperm.slane %v287, 1
    %v291 = vperm.slane %v287, 2
    %v292 = vperm.slane %v287, 3
    %v305 = vunpack.c.l.b16 %v83
    %v306 = vunpack.c.h.b16 %v83
    %v307 = vunpack.c.l.b16 %v84
    %v308 = vunpack.c.h.b16 %v84
    %v309 = vunpack.c.l.b16 %v85
    %v310 = vunpack.c.h.b16 %v85
    %v311 = vunpack.c.l.b16 %v86
    %v312 = vunpack.c.l.b16 %v87
    %v313 = vunpack.c.h.b16 %v87
    %v314 = vunpack.c.l.b16 %v88
    %v315 = vunpack.c.h.b16 %v88
    %v316 = vunpack.c.l.b16 %v89
    %v317 = vunpack.c.h.b16 %v89
    %v318 = vunpack.c.l.b16 %v90
    %v319 = vpack.c.b16 %v312, %v305
    %v320 = vpack.c.b16 %v313, %v306
    %v321 = vpack.c.b16 %v314, %v307
    %v322 = vpack.c.b16 %v315, %v308
    %v323 = vpack.c.b16 %v316, %v309
    %v324 = vpack.c.b16 %v317, %v310
    %v325 = vpack.c.b16 %v318, %v311
    %v528 = vunpack.c.l.b16 %v91
    %v529 = vunpack.c.h.b16 %v91
    %v530 = vunpack.c.l.b16 %v92
    %v531 = vunpack.c.h.b16 %v92
    %v532 = vunpack.c.l.b16 %v93
    %v533 = vunpack.c.h.b16 %v93
    %v534 = vunpack.c.l.b16 %v94
    %v535 = vunpack.c.h.b16 %v94
    %v536 = vunpack.c.l.b16 %v95
    %v537 = vunpack.c.h.b16 %v95
    %v538 = vunpack.c.l.b16 %v96
    %v539 = vunpack.c.h.b16 %v96
    %v540 = vunpack.c.l.b16 %v97
    %v541 = vunpack.c.h.b16 %v97
    %v542 = vunpack.c.l.b16 %v98
    %v543 = vunpack.c.h.b16 %v98
    %v544 = vunpack.c.l.b16 %v99
    %v545 = vunpack.c.h.b16 %v99
    %v546 = vunpack.c.l.b16 %v100
    %v547 = vunpack.c.h.b16 %v100
    %v548 = vunpack.c.l.b16 %v101
    %v549 = vunpack.c.h.b16 %v101
    %v550 = vunpack.c.l.b16 %v102
    %v551 = vunpack.c.h.b16 %v102
    %v552 = vunpack.c.l.b16 %v103
    %v553 = vunpack.c.h.b16 %v103
    %v554 = vunpack.c.l.b16 %v104
    %v555 = vunpack.c.h.b16 %v104
    %v556 = vunpack.c.l.b16 %v105
    %v557 = vunpack.c.h.b16 %v105
    %v558 = vunpack.c.l.b16 %v106
    %v559 = vunpack.c.h.b16 %v106
    %v560 = vunpack.c.l.b16 %v107
    %v561 = vunpack.c.h.b16 %v107
    %v562 = vunpack.c.l.b16 %v108
    %v563 = vunpack.c.h.b16 %v108
    %v564 = vunpack.c.l.b16 %v109
    %v565 = vunpack.c.h.b16 %v109
    %v566 = vunpack.c.l.b16 %v110
    %v567 = vunpack.c.h.b16 %v110
    %v568 = vunpack.c.l.b16 %v111
    %v569 = vunpack.c.h.b16 %v111
    %v570 = vunpack.c.l.b16 %v112
    %v571 = vunpack.c.h.b16 %v112
    %v572 = vunpack.c.l.b16 %v113
    %v573 = vunpack.c.h.b16 %v113
    %v574 = vunpack.c.l.b16 %v114
    %v575 = vunpack.c.h.b16 %v114
    %v576 = vunpack.c.l.b16 %v115
    %v577 = vunpack.c.h.b16 %v115
    %v578 = vunpack.c.l.b16 %v116
    %v579 = vunpack.c.h.b16 %v116
    %v580 = vunpack.c.l.b16 %v117
    %v581 = vunpack.c.h.b16 %v117
    %v582 = vunpack.c.l.b16 %v118
    %v583 = vunpack.c.h.b16 %v118
    %v584 = vunpack.c.l.b16 %v119
    %v585 = vunpack.c.h.b16 %v119
    %v586 = vunpack.c.l.b16 %v120
    %v587 = vunpack.c.h.b16 %v120
    %v588 = vunpack.c.l.b16 %v121
    %v589 = vunpack.c.h.b16 %v121
    %v590 = vunpack.c.l.b16 %v122
    %v591 = vunpack.c.h.b16 %v122
    %v592 = vunpack.c.l.b16 %v123
    %v593 = vunpack.c.h.b16 %v123
    %v594 = vunpack.c.l.b16 %v124
    %v595 = vunpack.c.h.b16 %v124
    %v596 = vunpack.c.l.b16 %v125
    %v597 = vunpack.c.h.b16 %v125
    %v598 = vunpack.c.l.b16 %v126
    %v599 = vunpack.c.h.b16 %v126
    %v600 = vunpack.c.l.b16 %v127
    %v601 = vunpack.c.h.b16 %v127
    %v602 = vunpack.c.l.b16 %v128
    %v603 = vunpack.c.h.b16 %v128
    %v604 = vunpack.c.l.b16 %v129
    %v605 = vunpack.c.h.b16 %v129
    %v606 = vunpack.c.l.b16 %v130
    %v607 = vunpack.c.h.b16 %v130
    %v608 = vunpack.c.l.b16 %v131
    %v609 = vunpack.c.h.b16 %v131
    %v610 = vunpack.c.l.b16 %v132
    %v611 = vunpack.c.h.b16 %v132
    %v612 = vunpack.c.l.b16 %v133
    %v613 = vunpack.c.h.b16 %v133
    %v614 = vunpack.c.l.b16 %v134
    %v615 = vunpack.c.h.b16 %v134
    %v616 = vunpack.c.l.b16 %v135
    %v617 = vunpack.c.h.b16 %v135
    %v618 = vunpack.c.l.b16 %v136
    %v619 = vunpack.c.h.b16 %v136
    %v620 = vunpack.c.l.b16 %v137
    %v621 = vunpack.c.h.b16 %v137
    %v622 = vunpack.c.l.b16 %v138
    %v623 = vunpack.c.h.b16 %v138
    %v624 = vunpack.c.l.b16 %v139
    %v625 = vunpack.c.h.b16 %v139
    %v626 = vunpack.c.l.b16 %v140
    %v627 = vunpack.c.h.b16 %v140
    %v628 = vunpack.c.l.b16 %v141
    %v629 = vunpack.c.h.b16 %v141
    %v630 = vunpack.c.l.b16 %v142
    %v631 = vunpack.c.h.b16 %v142
    %v632 = vunpack.c.l.b16 %v143
    %v633 = vunpack.c.h.b16 %v143
    %v634 = vunpack.c.l.b16 %v144
    %v635 = vunpack.c.h.b16 %v144
    %v636 = vunpack.c.l.b16 %v145
    %v637 = vunpack.c.h.b16 %v145
    %v638 = vunpack.c.l.b16 %v146
    %v639 = vunpack.c.h.b16 %v146
    %v640 = vunpack.c.l.b16 %v147
    %v641 = vunpack.c.h.b16 %v147
    %v642 = vunpack.c.l.b16 %v148
    %v643 = vunpack.c.h.b16 %v148
    %v644 = vunpack.c.l.b16 %v149
    %v645 = vunpack.c.h.b16 %v149
    %v646 = vunpack.c.l.b16 %v150
    %v647 = vunpack.c.h.b16 %v150
    %v648 = vunpack.c.l.b16 %v151
    %v649 = vunpack.c.h.b16 %v151
    %v650 = vunpack.c.l.b16 %v152
    %v651 = vunpack.c.h.b16 %v152
    %v652 = vunpack.c.l.b16 %v153
    %v653 = vunpack.c.h.b16 %v153
    %v654 = vunpack.c.l.b16 %v154
    %v655 = vunpack.c.h.b16 %v154
    %v656 = vunpack.c.l.b16 %v155
    %v657 = vunpack.c.h.b16 %v155
    %v658 = vunpack.c.l.b16 %v156
    %v659 = vunpack.c.h.b16 %v156
    %v660 = vunpack.c.l.b16 %v157
    %v661 = vunpack.c.h.b16 %v157
    %v662 = vunpack.c.l.b16 %v158
    %v663 = vunpack.c.h.b16 %v158
    %v664 = vunpack.c.l.b16 %v159
    %v665 = vunpack.c.h.b16 %v159
    %v666 = vunpack.c.l.b16 %v160
    %v667 = vunpack.c.h.b16 %v160
    %v668 = vunpack.c.l.b16 %v161
    %v669 = vunpack.c.h.b16 %v161
    %v670 = vunpack.c.l.b16 %v162
    %v671 = vunpack.c.h.b16 %v162
    %v672 = vunpack.c.l.b16 %v163
    %v673 = vunpack.c.h.b16 %v163
    %v674 = vunpack.c.l.b16 %v164
    %v675 = vunpack.c.h.b16 %v164
    %v676 = vunpack.c.l.b16 %v165
    %v677 = vunpack.c.h.b16 %v165
    %v678 = vunpack.c.l.b16 %v166
    %v679 = vunpack.c.h.b16 %v166
    %v680 = vunpack.c.l.b16 %v167
    %v681 = vunpack.c.h.b16 %v167
    %v682 = vunpack.c.l.b16 %v168
    %v683 = vunpack.c.h.b16 %v168
    %v684 = vunpack.c.l.b16 %v169
    %v685 = vunpack.c.h.b16 %v169
    %v686 = vunpack.c.l.b16 %v170
    %v687 = vunpack.c.h.b16 %v170
    %v688 = vunpack.c.l.b16 %v171
    %v689 = vunpack.c.h.b16 %v171
    %v690 = vunpack.c.l.b16 %v172
    %v691 = vunpack.c.h.b16 %v172
    %v692 = vunpack.c.l.b16 %v173
    %v693 = vunpack.c.h.b16 %v173
    %v694 = vunpack.c.l.b16 %v174
    %v695 = vunpack.c.h.b16 %v174
    %v696 = vunpack.c.l.b16 %v175
    %v697 = vunpack.c.h.b16 %v175
    %v698 = vunpack.c.l.b16 %v176
    %v699 = vunpack.c.h.b16 %v176
    %v700 = vunpack.c.l.b16 %v177
    %v701 = vunpack.c.h.b16 %v177
    %v702 = vunpack.c.l.b16 %v178
    %v703 = vunpack.c.h.b16 %v178
    %v704 = vunpack.c.l.b16 %v179
    %v705 = vunpack.c.h.b16 %v179
    %v706 = vunpack.c.l.b16 %v180
    %v707 = vunpack.c.h.b16 %v180
    %v708 = vunpack.c.l.b16 %v181
    %v709 = vunpack.c.h.b16 %v181
    %v710 = vunpack.c.l.b16 %v182
    %v711 = vunpack.c.h.b16 %v182
    %v712 = vunpack.c.l.b16 %v183
    %v713 = vunpack.c.h.b16 %v183
    %v714 = vunpack.c.l.b16 %v184
    %v715 = vunpack.c.h.b16 %v184
    %v716 = vunpack.c.l.b16 %v185
    %v717 = vunpack.c.h.b16 %v185
    %v718 = vunpack.c.l.b16 %v186
    %v719 = vunpack.c.h.b16 %v186
    %v720 = vunpack.c.l.b16 %v187
    %v721 = vunpack.c.h.b16 %v187
    %v722 = vunpack.c.l.b16 %v188
    %v723 = vunpack.c.h.b16 %v188
    %v724 = vunpack.c.l.b16 %v189
    %v725 = vunpack.c.h.b16 %v189
    %v726 = vunpack.c.l.b16 %v190
    %v727 = vunpack.c.h.b16 %v190
    %v728 = vunpack.c.l.b16 %v191
    %v729 = vunpack.c.h.b16 %v191
    %v730 = vunpack.c.l.b16 %v192
    %v731 = vunpack.c.h.b16 %v192
    %v732 = vunpack.c.l.b16 %v193
    %v733 = vunpack.c.h.b16 %v193
    %v734 = vunpack.c.l.b16 %v194
    %v735 = vunpack.c.h.b16 %v194
    %v736 = vunpack.c.l.b16 %v195
    %v737 = vunpack.c.h.b16 %v195
    %v738 = vunpack.c.l.b16 %v196
    %v739 = vunpack.c.h.b16 %v196
    %v740 = vunpack.c.l.b16 %v197
    %v741 = vunpack.c.h.b16 %v197
    %v742 = vunpack.c.l.b16 %v198
    %v743 = vunpack.c.h.b16 %v198
    %v744 = vunpack.c.l.b16 %v199
    %v745 = vunpack.c.h.b16 %v199
    %v746 = vunpack.c.l.b16 %v200
    %v747 = vunpack.c.h.b16 %v200
    %v748 = vunpack.c.l.b16 %v201
    %v749 = vunpack.c.h.b16 %v201
    %v750 = vunpack.c.l.b16 %v202
    %v751 = vunpack.c.h.b16 %v202
    %v752 = vunpack.c.l.b16 %v203
    %v753 = vunpack.c.h.b16 %v203
    %v754 = vunpack.c.l.b16 %v204
    %v755 = vunpack.c.h.b16 %v204
    %v756 = vunpack.c.l.b16 %v205
    %v757 = vunpack.c.h.b16 %v205
    %v758 = vunpack.c.l.b16 %v206
    %v759 = vunpack.c.h.b16 %v206
    %v760 = vunpack.c.l.b16 %v207
    %v761 = vunpack.c.h.b16 %v207
    %v762 = vunpack.c.l.b16 %v208
    %v763 = vunpack.c.h.b16 %v208
    %v764 = vunpack.c.l.b16 %v209
    %v765 = vunpack.c.h.b16 %v209
    %v766 = vunpack.c.l.b16 %v210
    %v767 = vunpack.c.h.b16 %v210
    %v768 = vunpack.c.l.b16 %v211
    %v769 = vunpack.c.h.b16 %v211
    %v770 = vunpack.c.l.b16 %v212
    %v771 = vunpack.c.h.b16 %v212
    %v772 = vunpack.c.l.b16 %v213
    %v773 = vunpack.c.h.b16 %v213
    %v774 = vunpack.c.l.b16 %v214
    %v775 = vunpack.c.h.b16 %v214
    %v776 = vunpack.c.l.b16 %v215
    %v777 = vunpack.c.h.b16 %v215
    %v778 = vunpack.c.l.b16 %v216
    %v779 = vunpack.c.h.b16 %v216
    %v780 = vunpack.c.l.b16 %v217
    %v781 = vunpack.c.h.b16 %v217
    %v782 = vunpack.c.l.b16 %v218
    %v783 = vunpack.c.h.b16 %v218
    %v784 = vunpack.c.l.b16 %v219
    %v785 = vunpack.c.h.b16 %v219
    %v786 = vunpack.c.l.b16 %v220
    %v787 = vunpack.c.h.b16 %v220
    %v788 = vunpack.c.l.b16 %v221
    %v789 = vunpack.c.h.b16 %v221
    %v790 = vunpack.c.l.b16 %v222
    %v791 = vunpack.c.h.b16 %v222
    %v792 = vunpack.c.l.b16 %v223
    %v793 = vunpack.c.h.b16 %v223
    %v794 = vunpack.c.l.b16 %v224
    %v795 = vunpack.c.h.b16 %v224
    %v796 = vunpack.c.l.b16 %v225
    %v797 = vunpack.c.h.b16 %v225
    %v798 = vunpack.c.l.b16 %v226
    %v799 = vunpack.c.h.b16 %v226
    %v800 = vunpack.c.l.b16 %v227
    %v801 = vunpack.c.h.b16 %v227
    %v802 = vunpack.c.l.b16 %v228
    %v803 = vunpack.c.h.b16 %v228
    %v804 = vunpack.c.l.b16 %v229
    %v805 = vunpack.c.h.b16 %v229
    %v806 = vunpack.c.l.b16 %v230
    %v807 = vunpack.c.h.b16 %v230
    %v808 = vunpack.c.l.b16 %v231
    %v809 = vunpack.c.h.b16 %v231
    %v810 = vunpack.c.l.b16 %v232
    %v811 = vunpack.c.h.b16 %v232
    %v812 = vunpack.c.l.b16 %v233
    %v813 = vunpack.c.h.b16 %v233
    %v814 = vunpack.c.l.b16 %v234
    %v815 = vunpack.c.h.b16 %v234
    %v816 = vunpack.c.l.b16 %v235
    %v817 = vunpack.c.h.b16 %v235
    %v818 = vunpack.c.l.b16 %v236
    %v819 = vunpack.c.h.b16 %v236
    %v820 = vunpack.c.l.b16 %v237
    %v821 = vunpack.c.h.b16 %v237
    %v822 = vunpack.c.l.b16 %v238
    %v823 = vunpack.c.h.b16 %v238
    %v824 = vunpack.c.l.b16 %v239
    %v825 = vunpack.c.h.b16 %v239
    %v826 = vunpack.c.l.b16 %v240
    %v827 = vunpack.c.h.b16 %v240
    %v828 = vunpack.c.l.b16 %v241
    %v829 = vunpack.c.h.b16 %v241
    %v830 = vunpack.c.l.b16 %v242
    %v831 = vunpack.c.h.b16 %v242
    %v832 = vunpack.c.l.b16 %v243
    %v833 = vunpack.c.h.b16 %v243
    %v834 = vunpack.c.l.b16 %v244
    %v835 = vunpack.c.h.b16 %v244
    %v836 = vunpack.c.l.b16 %v245
    %v837 = vunpack.c.h.b16 %v245
    %v838 = vunpack.c.l.b16 %v246
    %v839 = vunpack.c.h.b16 %v246
    %v840 = vunpack.c.l.b16 %v247
    %v841 = vunpack.c.h.b16 %v247
    %v842 = vunpack.c.l.b16 %v248
    %v843 = vunpack.c.h.b16 %v248
    %v844 = vunpack.c.l.b16 %v249
    %v845 = vunpack.c.h.b16 %v249
    %v846 = vunpack.c.l.b16 %v250
    %v847 = vunpack.c.h.b16 %v250
    %v848 = vunpack.c.l.b16 %v251
    %v849 = vunpack.c.h.b16 %v251
    %v850 = vunpack.c.l.b16 %v252
    %v851 = vunpack.c.h.b16 %v252
    %v852 = vunpack.c.l.b16 %v253
    %v853 = vunpack.c.h.b16 %v253
    %v854 = vunpack.c.l.b16 %v254
    %v855 = vunpack.c.h.b16 %v254
    %v856 = vunpack.c.l.b16 %v255
    %v857 = vunpack.c.h.b16 %v255
    %v858 = vunpack.c.l.b16 %v256
    %v859 = vunpack.c.h.b16 %v256
    %v860 = vunpack.c.l.b16 %v257
    %v861 = vunpack.c.h.b16 %v257
    %v862 = vunpack.c.l.b16 %v258
    %v863 = vunpack.c.h.b16 %v258
    %v864 = vunpack.c.l.b16 %v259
    %v865 = vunpack.c.h.b16 %v259
    %v866 = vunpack.c.l.b16 %v260
    %v867 = vunpack.c.h.b16 %v260
    %v868 = vunpack.c.l.b16 %v261
    %v869 = vunpack.c.h.b16 %v261
    %v870 = vunpack.c.l.b16 %v262
    %v871 = vunpack.c.h.b16 %v262
    %v872 = vunpack.c.l.b16 %v263
    %v873 = vunpack.c.h.b16 %v263
    %v874 = vunpack.c.l.b16 %v264
    %v875 = vunpack.c.h.b16 %v264
    %v876 = vunpack.c.l.b16 %v265
    %v877 = vunpack.c.h.b16 %v265
    %v878 = vunpack.c.l.b16 %v266
    %v879 = vunpack.c.h.b16 %v266
    %v880 = vunpack.c.l.b16 %v267
    %v881 = vunpack.c.h.b16 %v267
    %v882 = vunpack.c.l.b16 %v268
    %v883 = vunpack.c.h.b16 %v268
    %v884 = vunpack.c.l.b16 %v269
    %v885 = vunpack.c.h.b16 %v269
    %v886 = vunpack.c.l.b16 %v270
    %v887 = vunpack.c.h.b16 %v270
    %v888 = vunpack.c.l.b16 %v271
    %v889 = vunpack.c.h.b16 %v271
    %v890 = vunpack.c.l.b16 %v272
    %v891 = vunpack.c.h.b16 %v272
    %v892 = vunpack.c.l.b16 %v273
    %v893 = vunpack.c.h.b16 %v273
    %v894 = vunpack.c.l.b16 %v274
    %v895 = vunpack.c.h.b16 %v274
    %v896 = vunpack.c.l.b16 %v275
    %v897 = vunpack.c.h.b16 %v275
    %v898 = vunpack.c.l.b16 %v276
    %v899 = vunpack.c.h.b16 %v276
    %v900 = vunpack.c.l.b16 %v277
    %v901 = vunpack.c.h.b16 %v277
    %v902 = vunpack.c.l.b16 %v278
    %v903 = vunpack.c.h.b16 %v278
    %v904 = vunpack.c.l.b16 %v279
    %v905 = vunpack.c.h.b16 %v279
    %v906 = vunpack.c.l.b16 %v280
    %v907 = vunpack.c.h.b16 %v280
    %v908 = vunpack.c.l.b16 %v281
    %v909 = vunpack.c.h.b16 %v281
    %v910 = vunpack.c.l.b16 %v282
    %v911 = vunpack.c.h.b16 %v282
    %v912 = vunpack.c.l.b16 %v283
    %v913 = vunpack.c.h.b16 %v283
    %v914 = vunpack.c.l.b16 %v284
    %v915 = vunpack.c.h.b16 %v284
    %v916 = vunpack.c.l.b16 %v285
    %v917 = vunpack.c.h.b16 %v285
    %v918 = vunpack.c.l.b16 %v286
    %v919 = vunpack.c.h.b16 %v286
    %v920 = vpack.c.b16 %v532, %v528
    %v921 = vpack.c.b16 %v533, %v529
    %v922 = vpack.c.b16 %v534, %v530
    %v923 = vpack.c.b16 %v535, %v531
    %v924 = vpack.c.b16 %v540, %v536
    %v925 = vpack.c.b16 %v541, %v537
    %v926 = vpack.c.b16 %v542, %v538
    %v927 = vpack.c.b16 %v543, %v539
    %v928 = vpack.c.b16 %v548, %v544
    %v929 = vpack.c.b16 %v549, %v545
    %v930 = vpack.c.b16 %v550, %v546
    %v931 = vpack.c.b16 %v551, %v547
    %v932 = vpack.c.b16 %v556, %v552
    %v933 = vpack.c.b16 %v557, %v553
    %v934 = vpack.c.b16 %v558, %v554
    %v935 = vpack.c.b16 %v559, %v555
    %v936 = vpack.c.b16 %v564, %v560
    %v937 = vpack.c.b16 %v565, %v561
    %v938 = vpack.c.b16 %v566, %v562
    %v939 = vpack.c.b16 %v567, %v563
    %v940 = vpack.c.b16 %v572, %v568
    %v941 = vpack.c.b16 %v573, %v569
    %v942 = vpack.c.b16 %v574, %v570
    %v943 = vpack.c.b16 %v575, %v571
    %v944 = vpack.c.b16 %v580, %v576
    %v945 = vpack.c.b16 %v581, %v577
    %v946 = vpack.c.b16 %v582, %v578
    %v947 = vpack.c.b16 %v583, %v579
    %v948 = vpack.c.b16 %v588, %v584
    %v949 = vpack.c.b16 %v589, %v585
    %v950 = vpack.c.b16 %v590, %v586
    %v951 = vpack.c.b16 %v591, %v587
    %v952 = vpack.c.b16 %v596, %v592
    %v953 = vpack.c.b16 %v597, %v593
    %v954 = vpack.c.b16 %v598, %v594
    %v955 = vpack.c.b16 %v599, %v595
    %v956 = vpack.c.b16 %v604, %v600
    %v957 = vpack.c.b16 %v605, %v601
    %v958 = vpack.c.b16 %v606, %v602
    %v959 = vpack.c.b16 %v607, %v603
    %v960 = vpack.c.b16 %v612, %v608
    %v961 = vpack.c.b16 %v613, %v609
    %v962 = vpack.c.b16 %v614, %v610
    %v963 = vpack.c.b16 %v615, %v611
    %v964 = vpack.c.b16 %v620, %v616
    %v965 = vpack.c.b16 %v621, %v617
    %v966 = vpack.c.b16 %v622, %v618
    %v967 = vpack.c.b16 %v623, %v619
    %v968 = vpack.c.b16 %v628, %v624
    %v969 = vpack.c.b16 %v629, %v625
    %v970 = vpack.c.b16 %v630, %v626
    %v971 = vpack.c.b16 %v631, %v627
    %v972 = vpack.c.b16 %v636, %v632
    %v973 = vpack.c.b16 %v637, %v633
    %v974 = vpack.c.b16 %v638, %v634
    %v975 = vpack.c.b16 %v639, %v635
    %v976 = vpack.c.b16 %v644, %v640
    %v977 = vpack.c.b16 %v645, %v641
    %v978 = vpack.c.b16 %v646, %v642
    %v979 = vpack.c.b16 %v647, %v643
    %v980 = vpack.c.b16 %v652, %v648
    %v981 = vpack.c.b16 %v653, %v649
    %v982 = vpack.c.b16 %v654, %v650
    %v983 = vpack.c.b16 %v655, %v651
    %v984 = vpack.c.b16 %v660, %v656
    %v985 = vpack.c.b16 %v661, %v657
    %v986 = vpack.c.b16 %v662, %v658
    %v987 = vpack.c.b16 %v663, %v659
    %v988 = vpack.c.b16 %v668, %v664
    %v989 = vpack.c.b16 %v669, %v665
    %v990 = vpack.c.b16 %v670, %v666
    %v991 = vpack.c.b16 %v671, %v667
    %v992 = vpack.c.b16 %v676, %v672
    %v993 = vpack.c.b16 %v677, %v673
    %v994 = vpack.c.b16 %v678, %v674
    %v995 = vpack.c.b16 %v679, %v675
    %v996 = vpack.c.b16 %v684, %v680
    %v997 = vpack.c.b16 %v685, %v681
    %v998 = vpack.c.b16 %v686, %v682
    %v999 = vpack.c.b16 %v687, %v683
    %v1000 = vpack.c.b16 %v692, %v688
    %v1001 = vpack.c.b16 %v693, %v689
    %v1002 = vpack.c.b16 %v694, %v690
    %v1003 = vpack.c.b16 %v695, %v691
    %v1004 = vpack.c.b16 %v700, %v696
    %v1005 = vpack.c.b16 %v701, %v697
    %v1006 = vpack.c.b16 %v702, %v698
    %v1007 = vpack.c.b16 %v703, %v699
    %v1008 = vpack.c.b16 %v708, %v704
    %v1009 = vpack.c.b16 %v709, %v705
    %v1010 = vpack.c.b16 %v710, %v706
    %v1011 = vpack.c.b16 %v711, %v707
    %v1012 = vpack.c.b16 %v716, %v712
    %v1013 = vpack.c.b16 %v717, %v713
    %v1014 = vpack.c.b16 %v718, %v714
    %v1015 = vpack.c.b16 %v719, %v715
    %v1016 = vpack.c.b16 %v724, %v720
    %v1017 = vpack.c.b16 %v725, %v721
    %v1018 = vpack.c.b16 %v726, %v722
    %v1019 = vpack.c.b16 %v727, %v723
    %v1020 = vpack.c.b16 %v732, %v728
    %v1021 = vpack.c.b16 %v733, %v729
    %v1022 = vpack.c.b16 %v734, %v730
    %v1023 = vpack.c.b16 %v735, %v731
    %v1024 = vpack.c.b16 %v740, %v736
    %v1025 = vpack.c.b16 %v741, %v737
    %v1026 = vpack.c.b16 %v742, %v738
    %v1027 = vpack.c.b16 %v743, %v739
    %v1028 = vpack.c.b16 %v748, %v744
    %v1029 = vpack.c.b16 %v749, %v745
    %v1030 = vpack.c.b16 %v750, %v746
    %v1031 = vpack.c.b16 %v751, %v747
    %v1032 = vpack.c.b16 %v756, %v752
    %v1033 = vpack.c.b16 %v757, %v753
    %v1034 = vpack.c.b16 %v758, %v754
    %v1035 = vpack.c.b16 %v759, %v755
    %v1036 = vpack.c.b16 %v764, %v760
    %v1037 = vpack.c.b16 %v765, %v761
    %v1038 = vpack.c.b16 %v766, %v762
    %v1039 = vpack.c.b16 %v767, %v763
    %v1040 = vpack.c.b16 %v772, %v768
    %v1041 = vpack.c.b16 %v773, %v769
    %v1042 = vpack.c.b16 %v774, %v770
    %v1043 = vpack.c.b16 %v775, %v771
    %v1044 = vpack.c.b16 %v780, %v776
    %v1045 = vpack.c.b16 %v781, %v777
    %v1046 = vpack.c.b16 %v782, %v778
    %v1047 = vpack.c.b16 %v783, %v779
    %v1048 = vpack.c.b16 %v788, %v784
    %v1049 = vpack.c.b16 %v789, %v785
    %v1050 = vpack.c.b16 %v790, %v786
    %v1051 = vpack.c.b16 %v791, %v787
    %v1052 = vpack.c.b16 %v796, %v792
    %v1053 = vpack.c.b16 %v797, %v793
    %v1054 = vpack.c.b16 %v798, %v794
    %v1055 = vpack.c.b16 %v799, %v795
    %v1056 = vpack.c.b16 %v804, %v800
    %v1057 = vpack.c.b16 %v805, %v801
    %v1058 = vpack.c.b16 %v806, %v802
    %v1059 = vpack.c.b16 %v807, %v803
    %v1060 = vpack.c.b16 %v812, %v808
    %v1061 = vpack.c.b16 %v813, %v809
    %v1062 = vpack.c.b16 %v814, %v810
    %v1063 = vpack.c.b16 %v815, %v811
    %v1064 = vpack.c.b16 %v820, %v816
    %v1065 = vpack.c.b16 %v821, %v817
    %v1066 = vpack.c.b16 %v822, %v818
    %v1067 = vpack.c.b16 %v823, %v819
    %v1068 = vpack.c.b16 %v828, %v824
    %v1069 = vpack.c.b16 %v829, %v825
    %v1070 = vpack.c.b16 %v830, %v826
    %v1071 = vpack.c.b16 %v831, %v827
    %v1072 = vpack.c.b16 %v836, %v832
    %v1073 = vpack.c.b16 %v837, %v833
    %v1074 = vpack.c.b16 %v838, %v834
    %v1075 = vpack.c.b16 %v839, %v835
    %v1076 = vpack.c.b16 %v844, %v840
    %v1077 = vpack.c.b16 %v845, %v841
    %v1078 = vpack.c.b16 %v846, %v842
    %v1079 = vpack.c.b16 %v847, %v843
    %v1080 = vpack.c.b16 %v852, %v848
    %v1081 = vpack.c.b16 %v853, %v849
    %v1082 = vpack.c.b16 %v854, %v850
    %v1083 = vpack.c.b16 %v855, %v851
    %v1084 = vpack.c.b16 %v860, %v856
    %v1085 = vpack.c.b16 %v861, %v857
    %v1086 = vpack.c.b16 %v862, %v858
    %v1087 = vpack.c.b16 %v863, %v859
    %v1088 = vpack.c.b16 %v868, %v864
    %v1089 = vpack.c.b16 %v869, %v865
    %v1090 = vpack.c.b16 %v870, %v866
    %v1091 = vpack.c.b16 %v871, %v867
    %v1092 = vpack.c.b16 %v876, %v872
    %v1093 = vpack.c.b16 %v877, %v873
    %v1094 = vpack.c.b16 %v878, %v874
    %v1095 = vpack.c.b16 %v879, %v875
    %v1096 = vpack.c.b16 %v884, %v880
    %v1097 = vpack.c.b16 %v885, %v881
    %v1098 = vpack.c.b16 %v886, %v882
    %v1099 = vpack.c.b16 %v887, %v883
    %v1100 = vpack.c.b16 %v892, %v888
    %v1101 = vpack.c.b16 %v893, %v889
    %v1102 = vpack.c.b16 %v894, %v890
    %v1103 = vpack.c.b16 %v895, %v891
    %v1104 = vpack.c.b16 %v900, %v896
    %v1105 = vpack.c.b16 %v901, %v897
    %v1106 = vpack.c.b16 %v902, %v898
    %v1107 = vpack.c.b16 %v903, %v899
    %v1108 = vpack.c.b16 %v908, %v904
    %v1109 = vpack.c.b16 %v909, %v905
    %v1110 = vpack.c.b16 %v910, %v906
    %v1111 = vpack.c.b16 %v911, %v907
    %v1112 = vpack.c.b16 %v916, %v912
    %v1113 = vpack.c.b16 %v917, %v913
    %v1114 = vpack.c.b16 %v918, %v914
    %v1115 = vpack.c.b16 %v919, %v915
    %vm1312 = vcmask 130048
    %v1314 = vsel %vm1312, %v325, 0
    %1316 = vmatpush.bf16.msra.mxu0 %v948
    %1317 = vmatpush.bf16.msra.mxu0 %v944
    %1318 = vmatpush.bf16.msra.mxu0 %v940
    %1319 = vmatpush.bf16.msra.mxu0 %v936
    %1320 = vmatpush.bf16.msra.mxu0 %v932
    %1321 = vmatpush.bf16.msra.mxu0 %v928
    %1322 = vmatpush.bf16.msra.mxu0 %v924
    %1323 = vmatpush.bf16.msra.mxu0 %v920
    %1324 = vmatmul.bf16.gmra.mxu0 %v319
    %v1325 = vpop.f32.mrf.mxu0
    %v1326 = vadd.f32 %v289, %v1325
    %v1327 = vpop.f32.mrf.mxu0
    %v1328 = vadd.f32 %v289, %v1327
    %1329 = vdwg.mxu0
    %1330 = vmatpush.bf16.msra.mxu0 %v980
    %1331 = vmatpush.bf16.msra.mxu0 %v976
    %1332 = vmatpush.bf16.msra.mxu0 %v972
    %1333 = vmatpush.bf16.msra.mxu0 %v968
    %1334 = vmatpush.bf16.msra.mxu0 %v964
    %1335 = vmatpush.bf16.msra.mxu0 %v960
    %1336 = vmatpush.bf16.msra.mxu0 %v956
    %1337 = vmatpush.bf16.msra.mxu0 %v952
    %1338 = vmatmul.bf16.gmra.mxu0 %v320
    %v1339 = vpop.f32.mrf.mxu0
    %v1340 = vadd.f32 %v1326, %v1339
    %v1341 = vpop.f32.mrf.mxu0
    %v1342 = vadd.f32 %v1328, %v1341
    %1343 = vdwg.mxu0
    %1344 = vmatpush.bf16.msra.mxu0 %v1012
    %1345 = vmatpush.bf16.msra.mxu0 %v1008
    %1346 = vmatpush.bf16.msra.mxu0 %v1004
    %1347 = vmatpush.bf16.msra.mxu0 %v1000
    %1348 = vmatpush.bf16.msra.mxu0 %v996
    %1349 = vmatpush.bf16.msra.mxu0 %v992
    %1350 = vmatpush.bf16.msra.mxu0 %v988
    %1351 = vmatpush.bf16.msra.mxu0 %v984
    %1352 = vmatmul.bf16.gmra.mxu0 %v321
    %v1353 = vpop.f32.mrf.mxu0
    %v1354 = vadd.f32 %v1340, %v1353
    %v1355 = vpop.f32.mrf.mxu0
    %v1356 = vadd.f32 %v1342, %v1355
    %1357 = vdwg.mxu0
    %1358 = vmatpush.bf16.msra.mxu0 %v1044
    %1359 = vmatpush.bf16.msra.mxu0 %v1040
    %1360 = vmatpush.bf16.msra.mxu0 %v1036
    %1361 = vmatpush.bf16.msra.mxu0 %v1032
    %1362 = vmatpush.bf16.msra.mxu0 %v1028
    %1363 = vmatpush.bf16.msra.mxu0 %v1024
    %1364 = vmatpush.bf16.msra.mxu0 %v1020
    %1365 = vmatpush.bf16.msra.mxu0 %v1016
    %1366 = vmatmul.bf16.gmra.mxu0 %v322
    %v1367 = vpop.f32.mrf.mxu0
    %v1368 = vadd.f32 %v1354, %v1367
    %v1369 = vpop.f32.mrf.mxu0
    %v1370 = vadd.f32 %v1356, %v1369
    %1371 = vdwg.mxu0
    %1372 = vmatpush.bf16.msra.mxu0 %v1076
    %1373 = vmatpush.bf16.msra.mxu0 %v1072
    %1374 = vmatpush.bf16.msra.mxu0 %v1068
    %1375 = vmatpush.bf16.msra.mxu0 %v1064
    %1376 = vmatpush.bf16.msra.mxu0 %v1060
    %1377 = vmatpush.bf16.msra.mxu0 %v1056
    %1378 = vmatpush.bf16.msra.mxu0 %v1052
    %1379 = vmatpush.bf16.msra.mxu0 %v1048
    %1380 = vmatmul.bf16.gmra.mxu0 %v323
    %v1381 = vpop.f32.mrf.mxu0
    %v1382 = vadd.f32 %v1368, %v1381
    %v1383 = vpop.f32.mrf.mxu0
    %v1384 = vadd.f32 %v1370, %v1383
    %1385 = vdwg.mxu0
    %1386 = vmatpush.bf16.msra.mxu0 %v1108
    %1387 = vmatpush.bf16.msra.mxu0 %v1104
    %1388 = vmatpush.bf16.msra.mxu0 %v1100
    %1389 = vmatpush.bf16.msra.mxu0 %v1096
    %1390 = vmatpush.bf16.msra.mxu0 %v1092
    %1391 = vmatpush.bf16.msra.mxu0 %v1088
    %1392 = vmatpush.bf16.msra.mxu0 %v1084
    %1393 = vmatpush.bf16.msra.mxu0 %v1080
    %1394 = vmatmul.bf16.gmra.mxu0 %v324
    %v1395 = vpop.f32.mrf.mxu0
    %v1396 = vadd.f32 %v1382, %v1395
    %v1397 = vpop.f32.mrf.mxu0
    %v1398 = vadd.f32 %v1384, %v1397
    %1399 = vdwg.mxu0
    %1400 = vmatpush.bf16.msra.mxu0 0
    %1401 = vmatpush.bf16.msra.mxu0 0
    %1402 = vmatpush.bf16.msra.mxu0 0
    %1403 = vmatpush.bf16.msra.mxu0 0
    %1404 = vmatpush.bf16.msra.mxu0 0
    %1405 = vmatpush.bf16.msra.mxu0 0
    %1406 = vmatpush.bf16.msra.mxu0 0
    %1407 = vmatpush.bf16.msra.mxu0 %v1112
    %1408 = vmatmul.bf16.gmra.mxu0 %v1314
    %v1409 = vpop.f32.mrf.mxu0
    %v1410 = vadd.f32 %v1396, %v1409
    %v1411 = vpop.f32.mrf.mxu0
    %v1412 = vadd.f32 %v1398, %v1411
    %1413 = vdwg.mxu0
    %1414 = vmatpush.bf16.msra.mxu0 %v949
    %1415 = vmatpush.bf16.msra.mxu0 %v945
    %1416 = vmatpush.bf16.msra.mxu0 %v941
    %1417 = vmatpush.bf16.msra.mxu0 %v937
    %1418 = vmatpush.bf16.msra.mxu0 %v933
    %1419 = vmatpush.bf16.msra.mxu0 %v929
    %1420 = vmatpush.bf16.msra.mxu0 %v925
    %1421 = vmatpush.bf16.msra.mxu0 %v921
    %1422 = vmatmul.bf16.gmra.mxu0 %v319
    %v1423 = vpop.f32.mrf.mxu0
    %v1424 = vadd.f32 %v290, %v1423
    %v1425 = vpop.f32.mrf.mxu0
    %v1426 = vadd.f32 %v290, %v1425
    %1427 = vdwg.mxu0
    %1428 = vmatpush.bf16.msra.mxu0 %v981
    %1429 = vmatpush.bf16.msra.mxu0 %v977
    %1430 = vmatpush.bf16.msra.mxu0 %v973
    %1431 = vmatpush.bf16.msra.mxu0 %v969
    %1432 = vmatpush.bf16.msra.mxu0 %v965
    %1433 = vmatpush.bf16.msra.mxu0 %v961
    %1434 = vmatpush.bf16.msra.mxu0 %v957
    %1435 = vmatpush.bf16.msra.mxu0 %v953
    %1436 = vmatmul.bf16.gmra.mxu0 %v320
    %v1437 = vpop.f32.mrf.mxu0
    %v1438 = vadd.f32 %v1424, %v1437
    %v1439 = vpop.f32.mrf.mxu0
    %v1440 = vadd.f32 %v1426, %v1439
    %1441 = vdwg.mxu0
    %1442 = vmatpush.bf16.msra.mxu0 %v1013
    %1443 = vmatpush.bf16.msra.mxu0 %v1009
    %1444 = vmatpush.bf16.msra.mxu0 %v1005
    %1445 = vmatpush.bf16.msra.mxu0 %v1001
    %1446 = vmatpush.bf16.msra.mxu0 %v997
    %1447 = vmatpush.bf16.msra.mxu0 %v993
    %1448 = vmatpush.bf16.msra.mxu0 %v989
    %1449 = vmatpush.bf16.msra.mxu0 %v985
    %1450 = vmatmul.bf16.gmra.mxu0 %v321
    %v1451 = vpop.f32.mrf.mxu0
    %v1452 = vadd.f32 %v1438, %v1451
    %v1453 = vpop.f32.mrf.mxu0
    %v1454 = vadd.f32 %v1440, %v1453
    %1455 = vdwg.mxu0
    %1456 = vmatpush.bf16.msra.mxu0 %v1045
    %1457 = vmatpush.bf16.msra.mxu0 %v1041
    %1458 = vmatpush.bf16.msra.mxu0 %v1037
    %1459 = vmatpush.bf16.msra.mxu0 %v1033
    %1460 = vmatpush.bf16.msra.mxu0 %v1029
    %1461 = vmatpush.bf16.msra.mxu0 %v1025
    %1462 = vmatpush.bf16.msra.mxu0 %v1021
    %1463 = vmatpush.bf16.msra.mxu0 %v1017
    %1464 = vmatmul.bf16.gmra.mxu0 %v322
    %v1465 = vpop.f32.mrf.mxu0
    %v1466 = vadd.f32 %v1452, %v1465
    %v1467 = vpop.f32.mrf.mxu0
    %v1468 = vadd.f32 %v1454, %v1467
    %1469 = vdwg.mxu0
    %1470 = vmatpush.bf16.msra.mxu0 %v1077
    %1471 = vmatpush.bf16.msra.mxu0 %v1073
    %1472 = vmatpush.bf16.msra.mxu0 %v1069
    %1473 = vmatpush.bf16.msra.mxu0 %v1065
    %1474 = vmatpush.bf16.msra.mxu0 %v1061
    %1475 = vmatpush.bf16.msra.mxu0 %v1057
    %1476 = vmatpush.bf16.msra.mxu0 %v1053
    %1477 = vmatpush.bf16.msra.mxu0 %v1049
    %1478 = vmatmul.bf16.gmra.mxu0 %v323
    %v1479 = vpop.f32.mrf.mxu0
    %v1480 = vadd.f32 %v1466, %v1479
    %v1481 = vpop.f32.mrf.mxu0
    %v1482 = vadd.f32 %v1468, %v1481
    %1483 = vdwg.mxu0
    %1484 = vmatpush.bf16.msra.mxu0 %v1109
    %1485 = vmatpush.bf16.msra.mxu0 %v1105
    %1486 = vmatpush.bf16.msra.mxu0 %v1101
    %1487 = vmatpush.bf16.msra.mxu0 %v1097
    %1488 = vmatpush.bf16.msra.mxu0 %v1093
    %1489 = vmatpush.bf16.msra.mxu0 %v1089
    %1490 = vmatpush.bf16.msra.mxu0 %v1085
    %1491 = vmatpush.bf16.msra.mxu0 %v1081
    %1492 = vmatmul.bf16.gmra.mxu0 %v324
    %v1493 = vpop.f32.mrf.mxu0
    %v1494 = vadd.f32 %v1480, %v1493
    %v1495 = vpop.f32.mrf.mxu0
    %v1496 = vadd.f32 %v1482, %v1495
    %1497 = vdwg.mxu0
    %1498 = vmatpush.bf16.msra.mxu0 0
    %1499 = vmatpush.bf16.msra.mxu0 0
    %1500 = vmatpush.bf16.msra.mxu0 0
    %1501 = vmatpush.bf16.msra.mxu0 0
    %1502 = vmatpush.bf16.msra.mxu0 0
    %1503 = vmatpush.bf16.msra.mxu0 0
    %1504 = vmatpush.bf16.msra.mxu0 0
    %1505 = vmatpush.bf16.msra.mxu0 %v1113
    %1506 = vmatmul.bf16.gmra.mxu0 %v1314
    %v1507 = vpop.f32.mrf.mxu0
    %v1508 = vadd.f32 %v1494, %v1507
    %v1509 = vpop.f32.mrf.mxu0
    %v1510 = vadd.f32 %v1496, %v1509
    %1511 = vdwg.mxu0
    %1512 = vmatpush.bf16.msra.mxu0 %v950
    %1513 = vmatpush.bf16.msra.mxu0 %v946
    %1514 = vmatpush.bf16.msra.mxu0 %v942
    %1515 = vmatpush.bf16.msra.mxu0 %v938
    %1516 = vmatpush.bf16.msra.mxu0 %v934
    %1517 = vmatpush.bf16.msra.mxu0 %v930
    %1518 = vmatpush.bf16.msra.mxu0 %v926
    %1519 = vmatpush.bf16.msra.mxu0 %v922
    %1520 = vmatmul.bf16.gmra.mxu0 %v319
    %v1521 = vpop.f32.mrf.mxu0
    %v1522 = vadd.f32 %v291, %v1521
    %v1523 = vpop.f32.mrf.mxu0
    %v1524 = vadd.f32 %v291, %v1523
    %1525 = vdwg.mxu0
    %1526 = vmatpush.bf16.msra.mxu0 %v982
    %1527 = vmatpush.bf16.msra.mxu0 %v978
    %1528 = vmatpush.bf16.msra.mxu0 %v974
    %1529 = vmatpush.bf16.msra.mxu0 %v970
    %1530 = vmatpush.bf16.msra.mxu0 %v966
    %1531 = vmatpush.bf16.msra.mxu0 %v962
    %1532 = vmatpush.bf16.msra.mxu0 %v958
    %1533 = vmatpush.bf16.msra.mxu0 %v954
    %1534 = vmatmul.bf16.gmra.mxu0 %v320
    %v1535 = vpop.f32.mrf.mxu0
    %v1536 = vadd.f32 %v1522, %v1535
    %v1537 = vpop.f32.mrf.mxu0
    %v1538 = vadd.f32 %v1524, %v1537
    %1539 = vdwg.mxu0
    %1540 = vmatpush.bf16.msra.mxu0 %v1014
    %1541 = vmatpush.bf16.msra.mxu0 %v1010
    %1542 = vmatpush.bf16.msra.mxu0 %v1006
    %1543 = vmatpush.bf16.msra.mxu0 %v1002
    %1544 = vmatpush.bf16.msra.mxu0 %v998
    %1545 = vmatpush.bf16.msra.mxu0 %v994
    %1546 = vmatpush.bf16.msra.mxu0 %v990
    %1547 = vmatpush.bf16.msra.mxu0 %v986
    %1548 = vmatmul.bf16.gmra.mxu0 %v321
    %v1549 = vpop.f32.mrf.mxu0
    %v1550 = vadd.f32 %v1536, %v1549
    %v1551 = vpop.f32.mrf.mxu0
    %v1552 = vadd.f32 %v1538, %v1551
    %1553 = vdwg.mxu0
    %1554 = vmatpush.bf16.msra.mxu0 %v1046
    %1555 = vmatpush.bf16.msra.mxu0 %v1042
    %1556 = vmatpush.bf16.msra.mxu0 %v1038
    %1557 = vmatpush.bf16.msra.mxu0 %v1034
    %1558 = vmatpush.bf16.msra.mxu0 %v1030
    %1559 = vmatpush.bf16.msra.mxu0 %v1026
    %1560 = vmatpush.bf16.msra.mxu0 %v1022
    %1561 = vmatpush.bf16.msra.mxu0 %v1018
    %1562 = vmatmul.bf16.gmra.mxu0 %v322
    %v1563 = vpop.f32.mrf.mxu0
    %v1564 = vadd.f32 %v1550, %v1563
    %v1565 = vpop.f32.mrf.mxu0
    %v1566 = vadd.f32 %v1552, %v1565
    %1567 = vdwg.mxu0
    %1568 = vmatpush.bf16.msra.mxu0 %v1078
    %1569 = vmatpush.bf16.msra.mxu0 %v1074
    %1570 = vmatpush.bf16.msra.mxu0 %v1070
    %1571 = vmatpush.bf16.msra.mxu0 %v1066
    %1572 = vmatpush.bf16.msra.mxu0 %v1062
    %1573 = vmatpush.bf16.msra.mxu0 %v1058
    %1574 = vmatpush.bf16.msra.mxu0 %v1054
    %1575 = vmatpush.bf16.msra.mxu0 %v1050
    %1576 = vmatmul.bf16.gmra.mxu0 %v323
    %v1577 = vpop.f32.mrf.mxu0
    %v1578 = vadd.f32 %v1564, %v1577
    %v1579 = vpop.f32.mrf.mxu0
    %v1580 = vadd.f32 %v1566, %v1579
    %1581 = vdwg.mxu0
    %1582 = vmatpush.bf16.msra.mxu0 %v1110
    %1583 = vmatpush.bf16.msra.mxu0 %v1106
    %1584 = vmatpush.bf16.msra.mxu0 %v1102
    %1585 = vmatpush.bf16.msra.mxu0 %v1098
    %1586 = vmatpush.bf16.msra.mxu0 %v1094
    %1587 = vmatpush.bf16.msra.mxu0 %v1090
    %1588 = vmatpush.bf16.msra.mxu0 %v1086
    %1589 = vmatpush.bf16.msra.mxu0 %v1082
    %1590 = vmatmul.bf16.gmra.mxu0 %v324
    %v1591 = vpop.f32.mrf.mxu0
    %v1592 = vadd.f32 %v1578, %v1591
    %v1593 = vpop.f32.mrf.mxu0
    %v1594 = vadd.f32 %v1580, %v1593
    %1595 = vdwg.mxu0
    %1596 = vmatpush.bf16.msra.mxu0 0
    %1597 = vmatpush.bf16.msra.mxu0 0
    %1598 = vmatpush.bf16.msra.mxu0 0
    %1599 = vmatpush.bf16.msra.mxu0 0
    %1600 = vmatpush.bf16.msra.mxu0 0
    %1601 = vmatpush.bf16.msra.mxu0 0
    %1602 = vmatpush.bf16.msra.mxu0 0
    %1603 = vmatpush.bf16.msra.mxu0 %v1114
    %1604 = vmatmul.bf16.gmra.mxu0 %v1314
    %v1605 = vpop.f32.mrf.mxu0
    %v1606 = vadd.f32 %v1592, %v1605
    %v1607 = vpop.f32.mrf.mxu0
    %v1608 = vadd.f32 %v1594, %v1607
    %1609 = vdwg.mxu0
    %1610 = vmatpush.bf16.msra.mxu0 %v951
    %1611 = vmatpush.bf16.msra.mxu0 %v947
    %1612 = vmatpush.bf16.msra.mxu0 %v943
    %1613 = vmatpush.bf16.msra.mxu0 %v939
    %1614 = vmatpush.bf16.msra.mxu0 %v935
    %1615 = vmatpush.bf16.msra.mxu0 %v931
    %1616 = vmatpush.bf16.msra.mxu0 %v927
    %1617 = vmatpush.bf16.msra.mxu0 %v923
    %1618 = vmatmul.bf16.gmra.mxu0 %v319
    %v1619 = vpop.f32.mrf.mxu0
    %v1620 = vadd.f32 %v292, %v1619
    %v1621 = vpop.f32.mrf.mxu0
    %v1622 = vadd.f32 %v292, %v1621
    %1623 = vdwg.mxu0
    %1624 = vmatpush.bf16.msra.mxu0 %v983
    %1625 = vmatpush.bf16.msra.mxu0 %v979
    %1626 = vmatpush.bf16.msra.mxu0 %v975
    %1627 = vmatpush.bf16.msra.mxu0 %v971
    %1628 = vmatpush.bf16.msra.mxu0 %v967
    %1629 = vmatpush.bf16.msra.mxu0 %v963
    %1630 = vmatpush.bf16.msra.mxu0 %v959
    %1631 = vmatpush.bf16.msra.mxu0 %v955
    %1632 = vmatmul.bf16.gmra.mxu0 %v320
    %v1633 = vpop.f32.mrf.mxu0
    %v1634 = vadd.f32 %v1620, %v1633
    %v1635 = vpop.f32.mrf.mxu0
    %v1636 = vadd.f32 %v1622, %v1635
    %1637 = vdwg.mxu0
    %1638 = vmatpush.bf16.msra.mxu0 %v1015
    %1639 = vmatpush.bf16.msra.mxu0 %v1011
    %1640 = vmatpush.bf16.msra.mxu0 %v1007
    %1641 = vmatpush.bf16.msra.mxu0 %v1003
    %1642 = vmatpush.bf16.msra.mxu0 %v999
    %1643 = vmatpush.bf16.msra.mxu0 %v995
    %1644 = vmatpush.bf16.msra.mxu0 %v991
    %1645 = vmatpush.bf16.msra.mxu0 %v987
    %1646 = vmatmul.bf16.gmra.mxu0 %v321
    %v1647 = vpop.f32.mrf.mxu0
    %v1648 = vadd.f32 %v1634, %v1647
    %v1649 = vpop.f32.mrf.mxu0
    %v1650 = vadd.f32 %v1636, %v1649
    %1651 = vdwg.mxu0
    %1652 = vmatpush.bf16.msra.mxu0 %v1047
    %1653 = vmatpush.bf16.msra.mxu0 %v1043
    %1654 = vmatpush.bf16.msra.mxu0 %v1039
    %1655 = vmatpush.bf16.msra.mxu0 %v1035
    %1656 = vmatpush.bf16.msra.mxu0 %v1031
    %1657 = vmatpush.bf16.msra.mxu0 %v1027
    %1658 = vmatpush.bf16.msra.mxu0 %v1023
    %1659 = vmatpush.bf16.msra.mxu0 %v1019
    %1660 = vmatmul.bf16.gmra.mxu0 %v322
    %v1661 = vpop.f32.mrf.mxu0
    %v1662 = vadd.f32 %v1648, %v1661
    %v1663 = vpop.f32.mrf.mxu0
    %v1664 = vadd.f32 %v1650, %v1663
    %1665 = vdwg.mxu0
    %1666 = vmatpush.bf16.msra.mxu0 %v1079
    %1667 = vmatpush.bf16.msra.mxu0 %v1075
    %1668 = vmatpush.bf16.msra.mxu0 %v1071
    %1669 = vmatpush.bf16.msra.mxu0 %v1067
    %1670 = vmatpush.bf16.msra.mxu0 %v1063
    %1671 = vmatpush.bf16.msra.mxu0 %v1059
    %1672 = vmatpush.bf16.msra.mxu0 %v1055
    %1673 = vmatpush.bf16.msra.mxu0 %v1051
    %1674 = vmatmul.bf16.gmra.mxu0 %v323
    %v1675 = vpop.f32.mrf.mxu0
    %v1676 = vadd.f32 %v1662, %v1675
    %v1677 = vpop.f32.mrf.mxu0
    %v1678 = vadd.f32 %v1664, %v1677
    %1679 = vdwg.mxu0
    %1680 = vmatpush.bf16.msra.mxu0 %v1111
    %1681 = vmatpush.bf16.msra.mxu0 %v1107
    %1682 = vmatpush.bf16.msra.mxu0 %v1103
    %1683 = vmatpush.bf16.msra.mxu0 %v1099
    %1684 = vmatpush.bf16.msra.mxu0 %v1095
    %1685 = vmatpush.bf16.msra.mxu0 %v1091
    %1686 = vmatpush.bf16.msra.mxu0 %v1087
    %1687 = vmatpush.bf16.msra.mxu0 %v1083
    %1688 = vmatmul.bf16.gmra.mxu0 %v324
    %v1689 = vpop.f32.mrf.mxu0
    %v1690 = vadd.f32 %v1676, %v1689
    %v1691 = vpop.f32.mrf.mxu0
    %v1692 = vadd.f32 %v1678, %v1691
    %1693 = vdwg.mxu0
    %1694 = vmatpush.bf16.msra.mxu0 0
    %1695 = vmatpush.bf16.msra.mxu0 0
    %1696 = vmatpush.bf16.msra.mxu0 0
    %1697 = vmatpush.bf16.msra.mxu0 0
    %1698 = vmatpush.bf16.msra.mxu0 0
    %1699 = vmatpush.bf16.msra.mxu0 0
    %1700 = vmatpush.bf16.msra.mxu0 0
    %1701 = vmatpush.bf16.msra.mxu0 %v1115
    %1702 = vmatmul.bf16.gmra.mxu0 %v1314
    %v1703 = vpop.f32.mrf.mxu0
    %v1704 = vadd.f32 %v1690, %v1703
    %v1705 = vpop.f32.mrf.mxu0
    %v1706 = vadd.f32 %v1692, %v1705
    %1707 = vdwg.mxu0
    %v1708 = vmax.f32 %v1410, 0.0
    %v1709 = vmax.f32 %v1508, 0.0
    %v1710 = vmax.f32 %v1606, 0.0
    %v1711 = vmax.f32 %v1704, 0.0
    %v1712 = vmax.f32 %v1412, 0.0
    %v1713 = vmax.f32 %v1510, 0.0
    %v1714 = vmax.f32 %v1608, 0.0
    %v1715 = vmax.f32 %v1706, 0.0
    %v1716 = vpack.c.bf16 %v1712, %v1708
    %v1717 = vpack.c.bf16 %v1713, %v1709
    %v1718 = vpack.c.bf16 %v1714, %v1710
    %v1719 = vpack.c.bf16 %v1715, %v1711
    %v1720 = vld [vmem:[#allocation8] sm:$0xf]
    %v1721 = vld [vmem:[#allocation8 + $0x4] sm:$0xf]
    %v1722 = vld [vmem:[#allocation8 + $0x8] sm:$0xf]
    %v1723 = vld [vmem:[#allocation8 + $0xc] sm:$0xf]
    %v1724 = vld [vmem:[#allocation8 + $0x10] sm:$0xf]
    %v1725 = vld [vmem:[#allocation8 + $0x14] sm:$0xf]
    %v1726 = vld [vmem:[#allocation8 + $0x18] sm:$0xf]
    %v1727 = vld [vmem:[#allocation8 + $0x1c] sm:$0xf]
    %v1728 = vld [vmem:[#allocation8 + $0x20] sm:$0xf]
    %v1729 = vld [vmem:[#allocation8 + $0x24] sm:$0xf]
    %v1730 = vld [vmem:[#allocation8 + $0x28] sm:$0xf]
    %v1731 = vld [vmem:[#allocation8 + $0x2c] sm:$0xf]
    %v1732 = vld [vmem:[#allocation8 + $0x30] sm:$0xf]
    %v1733 = vld [vmem:[#allocation8 + $0x34] sm:$0xf]
    %v1734 = vld [vmem:[#allocation8 + $0x38] sm:$0xf]
    %v1735 = vld [vmem:[#allocation8 + $0x3c] sm:$0xf]
    %v1736 = vld [vmem:[#allocation8 + $0x40] sm:$0xf]
    %v1737 = vld [vmem:[#allocation8 + $0x44] sm:$0xf]
    %v1738 = vld [vmem:[#allocation8 + $0x48] sm:$0xf]
    %v1739 = vld [vmem:[#allocation8 + $0x4c] sm:$0xf]
    %v1740 = vld [vmem:[#allocation8 + $0x50] sm:$0xf]
    %v1741 = vld [vmem:[#allocation8 + $0x54] sm:$0xf]
    %v1742 = vld [vmem:[#allocation8 + $0x58] sm:$0xf]
    %v1743 = vld [vmem:[#allocation8 + $0x5c] sm:$0xf]
    %v1744 = vld [vmem:[#allocation8 + $0x60] sm:$0xf]
    %v1745 = vld [vmem:[#allocation8 + $0x64] sm:$0xf]
    %v1746 = vld [vmem:[#allocation8 + $0x68] sm:$0xf]
    %v1747 = vld [vmem:[#allocation8 + $0x6c] sm:$0xf]
    %v1748 = vld [vmem:[#allocation8 + $0x70] sm:$0xf]
    %v1749 = vld [vmem:[#allocation8 + $0x74] sm:$0xf]
    %v1750 = vld [vmem:[#allocation8 + $0x78] sm:$0xf]
    %v1751 = vld [vmem:[#allocation8 + $0x7c] sm:$0xf]
    %v1752 = vld [vmem:[#allocation8 + $0x80] sm:$0xf]
    %v1753 = vld [vmem:[#allocation8 + $0x84] sm:$0xf]
    %v1754 = vld [vmem:[#allocation8 + $0x88] sm:$0xf]
    %v1755 = vld [vmem:[#allocation8 + $0x8c] sm:$0xf]
    %v1756 = vld [vmem:[#allocation8 + $0x90] sm:$0xf]
    %v1757 = vld [vmem:[#allocation8 + $0x94] sm:$0xf]
    %v1758 = vld [vmem:[#allocation8 + $0x98] sm:$0xf]
    %v1759 = vld [vmem:[#allocation8 + $0x9c] sm:$0xf]
    %v1760 = vld [vmem:[#allocation8 + $0xa0] sm:$0xf]
    %v1761 = vld [vmem:[#allocation8 + $0xa4] sm:$0xf]
    %v1762 = vld [vmem:[#allocation8 + $0xa8] sm:$0xf]
    %v1763 = vld [vmem:[#allocation8 + $0xac] sm:$0xf]
    %v1764 = vld [vmem:[#allocation8 + $0xb0] sm:$0xf]
    %v1765 = vld [vmem:[#allocation8 + $0xb4] sm:$0xf]
    %v1766 = vld [vmem:[#allocation8 + $0xb8] sm:$0xf]
    %v1767 = vld [vmem:[#allocation8 + $0xbc] sm:$0xf]
    %v1768 = vld [vmem:[#allocation8 + $0xc0] sm:$0xf]
    %v1769 = vld [vmem:[#allocation8 + $0xc4] sm:$0xf]
    %v1770 = vld [vmem:[#allocation8 + $0xc8] sm:$0xf]
    %v1771 = vld [vmem:[#allocation8 + $0xcc] sm:$0xf]
    %v1772 = vld [vmem:[#allocation8 + $0xd0] sm:$0xf]
    %v1773 = vld [vmem:[#allocation8 + $0xd4] sm:$0xf]
    %v1774 = vld [vmem:[#allocation8 + $0xd8] sm:$0xf]
    %v1775 = vld [vmem:[#allocation8 + $0xdc] sm:$0xf]
    %v1776 = vld [vmem:[#allocation8 + $0xe0] sm:$0xf]
    %v1777 = vld [vmem:[#allocation8 + $0xe4] sm:$0xf]
    %v1778 = vld [vmem:[#allocation8 + $0xe8] sm:$0xf]
    %v1779 = vld [vmem:[#allocation8 + $0xec] sm:$0xf]
    %v1780 = vld [vmem:[#allocation8 + $0xf0] sm:$0xf]
    %v1781 = vld [vmem:[#allocation8 + $0xf4] sm:$0xf]
    %v1782 = vld [vmem:[#allocation8 + $0xf8] sm:$0xf]
    %v1783 = vld [vmem:[#allocation8 + $0xfc] sm:$0xf]
    %v1784 = vld [vmem:[%s4] sm:$0x1]
    %v1786 = vperm.slane %v1784, 0
    %v1852 = vunpack.c.l.b16 %v1720
    %v1853 = vunpack.c.l.b16 %v1721
    %v1854 = vunpack.c.l.b16 %v1722
    %v1855 = vunpack.c.l.b16 %v1723
    %v1856 = vunpack.c.l.b16 %v1724
    %v1857 = vunpack.c.l.b16 %v1725
    %v1858 = vunpack.c.l.b16 %v1726
    %v1859 = vunpack.c.l.b16 %v1727
    %v1860 = vunpack.c.l.b16 %v1728
    %v1861 = vunpack.c.l.b16 %v1729
    %v1862 = vunpack.c.l.b16 %v1730
    %v1863 = vunpack.c.l.b16 %v1731
    %v1864 = vunpack.c.l.b16 %v1732
    %v1865 = vunpack.c.l.b16 %v1733
    %v1866 = vunpack.c.l.b16 %v1734
    %v1867 = vunpack.c.l.b16 %v1735
    %v1868 = vunpack.c.l.b16 %v1736
    %v1869 = vunpack.c.l.b16 %v1737
    %v1870 = vunpack.c.l.b16 %v1738
    %v1871 = vunpack.c.l.b16 %v1739
    %v1872 = vunpack.c.l.b16 %v1740
    %v1873 = vunpack.c.l.b16 %v1741
    %v1874 = vunpack.c.l.b16 %v1742
    %v1875 = vunpack.c.l.b16 %v1743
    %v1876 = vunpack.c.l.b16 %v1744
    %v1877 = vunpack.c.l.b16 %v1745
    %v1878 = vunpack.c.l.b16 %v1746
    %v1879 = vunpack.c.l.b16 %v1747
    %v1880 = vunpack.c.l.b16 %v1748
    %v1881 = vunpack.c.l.b16 %v1749
    %v1882 = vunpack.c.l.b16 %v1750
    %v1883 = vunpack.c.l.b16 %v1751
    %v1884 = vunpack.c.l.b16 %v1752
    %v1885 = vunpack.c.l.b16 %v1753
    %v1886 = vunpack.c.l.b16 %v1754
    %v1887 = vunpack.c.l.b16 %v1755
    %v1888 = vunpack.c.l.b16 %v1756
    %v1889 = vunpack.c.l.b16 %v1757
    %v1890 = vunpack.c.l.b16 %v1758
    %v1891 = vunpack.c.l.b16 %v1759
    %v1892 = vunpack.c.l.b16 %v1760
    %v1893 = vunpack.c.l.b16 %v1761
    %v1894 = vunpack.c.l.b16 %v1762
    %v1895 = vunpack.c.l.b16 %v1763
    %v1896 = vunpack.c.l.b16 %v1764
    %v1897 = vunpack.c.l.b16 %v1765
    %v1898 = vunpack.c.l.b16 %v1766
    %v1899 = vunpack.c.l.b16 %v1767
    %v1900 = vunpack.c.l.b16 %v1768
    %v1901 = vunpack.c.l.b16 %v1769
    %v1902 = vunpack.c.l.b16 %v1770
    %v1903 = vunpack.c.l.b16 %v1771
    %v1904 = vunpack.c.l.b16 %v1772
    %v1905 = vunpack.c.l.b16 %v1773
    %v1906 = vunpack.c.l.b16 %v1774
    %v1907 = vunpack.c.l.b16 %v1775
    %v1908 = vunpack.c.l.b16 %v1776
    %v1909 = vunpack.c.l.b16 %v1777
    %v1910 = vunpack.c.l.b16 %v1778
    %v1911 = vunpack.c.l.b16 %v1779
    %v1912 = vunpack.c.l.b16 %v1780
    %v1913 = vunpack.c.l.b16 %v1781
    %v1914 = vunpack.c.l.b16 %v1782
    %v1915 = vunpack.c.l.b16 %v1783
    %v1916 = vpack.c.b16 %v1853, %v1852
    %v1917 = vpack.c.b16 %v1855, %v1854
    %v1918 = vpack.c.b16 %v1857, %v1856
    %v1919 = vpack.c.b16 %v1859, %v1858
    %v1920 = vpack.c.b16 %v1861, %v1860
    %v1921 = vpack.c.b16 %v1863, %v1862
    %v1922 = vpack.c.b16 %v1865, %v1864
    %v1923 = vpack.c.b16 %v1867, %v1866
    %v1924 = vpack.c.b16 %v1869, %v1868
    %v1925 = vpack.c.b16 %v1871, %v1870
    %v1926 = vpack.c.b16 %v1873, %v1872
    %v1927 = vpack.c.b16 %v1875, %v1874
    %v1928 = vpack.c.b16 %v1877, %v1876
    %v1929 = vpack.c.b16 %v1879, %v1878
    %v1930 = vpack.c.b16 %v1881, %v1880
    %v1931 = vpack.c.b16 %v1883, %v1882
    %v1932 = vpack.c.b16 %v1885, %v1884
    %v1933 = vpack.c.b16 %v1887, %v1886
    %v1934 = vpack.c.b16 %v1889, %v1888
    %v1935 = vpack.c.b16 %v1891, %v1890
    %v1936 = vpack.c.b16 %v1893, %v1892
    %v1937 = vpack.c.b16 %v1895, %v1894
    %v1938 = vpack.c.b16 %v1897, %v1896
    %v1939 = vpack.c.b16 %v1899, %v1898
    %v1940 = vpack.c.b16 %v1901, %v1900
    %v1941 = vpack.c.b16 %v1903, %v1902
    %v1942 = vpack.c.b16 %v1905, %v1904
    %v1943 = vpack.c.b16 %v1907, %v1906
    %v1944 = vpack.c.b16 %v1909, %v1908
    %v1945 = vpack.c.b16 %v1911, %v1910
    %v1946 = vpack.c.b16 %v1913, %v1912
    %v1947 = vpack.c.b16 %v1915, %v1914
    %1980 = vmatpush.bf16.msra.mxu0 %v1923
    %1981 = vmatpush.bf16.msra.mxu0 %v1922
    %1982 = vmatpush.bf16.msra.mxu0 %v1921
    %1983 = vmatpush.bf16.msra.mxu0 %v1920
    %1984 = vmatpush.bf16.msra.mxu0 %v1919
    %1985 = vmatpush.bf16.msra.mxu0 %v1918
    %1986 = vmatpush.bf16.msra.mxu0 %v1917
    %1987 = vmatpush.bf16.msra.mxu0 %v1916
    %1988 = vmatmul.bf16.gmra.mxu0 %v1716
    %v1989 = vpop.f32.mrf.mxu0
    %v1990 = vadd.f32 %v1786, %v1989
    %v1991 = vpop.f32.mrf.mxu0
    %v1992 = vadd.f32 %v1786, %v1991
    %1993 = vdwg.mxu0
    %1994 = vmatpush.bf16.msra.mxu0 %v1931
    %1995 = vmatpush.bf16.msra.mxu0 %v1930
    %1996 = vmatpush.bf16.msra.mxu0 %v1929
    %1997 = vmatpush.bf16.msra.mxu0 %v1928
    %1998 = vmatpush.bf16.msra.mxu0 %v1927
    %1999 = vmatpush.bf16.msra.mxu0 %v1926
    %2000 = vmatpush.bf16.msra.mxu0 %v1925
    %2001 = vmatpush.bf16.msra.mxu0 %v1924
    %2002 = vmatmul.bf16.gmra.mxu0 %v1717
    %v2003 = vpop.f32.mrf.mxu0
    %v2004 = vadd.f32 %v1990, %v2003
    %v2005 = vpop.f32.mrf.mxu0
    %v2006 = vadd.f32 %v1992, %v2005
    %2007 = vdwg.mxu0
    %2008 = vmatpush.bf16.msra.mxu0 %v1939
    %2009 = vmatpush.bf16.msra.mxu0 %v1938
    %2010 = vmatpush.bf16.msra.mxu0 %v1937
    %2011 = vmatpush.bf16.msra.mxu0 %v1936
    %2012 = vmatpush.bf16.msra.mxu0 %v1935
    %2013 = vmatpush.bf16.msra.mxu0 %v1934
    %2014 = vmatpush.bf16.msra.mxu0 %v1933
    %2015 = vmatpush.bf16.msra.mxu0 %v1932
    %2016 = vmatmul.bf16.gmra.mxu0 %v1718
    %v2017 = vpop.f32.mrf.mxu0
    %v2018 = vadd.f32 %v2004, %v2017
    %v2019 = vpop.f32.mrf.mxu0
    %v2020 = vadd.f32 %v2006, %v2019
    %2021 = vdwg.mxu0
    %2022 = vmatpush.bf16.msra.mxu0 %v1947
    %2023 = vmatpush.bf16.msra.mxu0 %v1946
    %2024 = vmatpush.bf16.msra.mxu0 %v1945
    %2025 = vmatpush.bf16.msra.mxu0 %v1944
    %2026 = vmatpush.bf16.msra.mxu0 %v1943
    %2027 = vmatpush.bf16.msra.mxu0 %v1942
    %2028 = vmatpush.bf16.msra.mxu0 %v1941
    %2029 = vmatpush.bf16.msra.mxu0 %v1940
    %2030 = vmatmul.bf16.gmra.mxu0 %v1719
    %v2031 = vpop.f32.mrf.mxu0
    %v2032 = vadd.f32 %v2018, %v2031
    %v2033 = vpop.f32.mrf.mxu0
    %v2034 = vadd.f32 %v2020, %v2033
    %2035 = vdwg.mxu0
    %2036 = vst [vmem:[#allocation10] sm:$0xff] %v2032
    %2037 = vst [vmem:[#allocation10 + $0x8] sm:$0xff] %v2034
    // Predicated region
    $region38: #{tpu_custom_call.1} parent=1 // pred_check
      _
    $region39: #{tpu_custom_call.1} parent=1 // pred_check_branch
      %2039 = sbr.rel (0) target = $region41
    $region40: #{tpu_custom_call.1} parent=1 // pred_region
      %2041 = vsyncadd [#allocation4], 0
      %s2042 = sshll.u32 [#allocation10], 4
      %s2043 = int_to_ptr.vmem [resolvable:$true] %s2042
      %s2044 = sshll.u32 %s5, 4
      %s2045 = int_to_ptr.hbm [resolvable:$true] %s2044
      %2050 = dma.vmem_to_hbm [thread:$0]  %s2043, 256, %s2045, [#allocation4], 128, 128, 8
    $region41: #{tpu_custom_call.1} parent=1 // pred_fallthru
      _
    // Predicated region
    $region42: #{tpu_custom_call.1} parent=1 // pred_check
      _
    $region43: #{tpu_custom_call.1} parent=1 // pred_check_branch
      %2052 = sbr.rel (0) target = $region45
    $region44: #{tpu_custom_call.1} parent=1 // pred_region
      %2054 = dma.done [#allocation4], 256
    $region45: #{tpu_custom_call.1} parent=1 // pred_fallthru
      _
    %2055 = vsyncpa [#allocation3], 1
    %2056 = vsyncpa [#allocation6], 1
    %2057 = vsyncpa [#allocation9], 1
    %2058 = vsyncpa [#allocation4], 1

</llo_original>
